<compile_context>
chip_gen: v7x
topology: tpu7x:2x2x1
jax: 0.10.0
libtpu: 0.0.40
codegen_flags: <defaults>
</compile_context>

<pallas_src>
import jax
import jax.numpy as jnp
from jax import lax
from jax.experimental import pallas as pl
from jax.experimental.pallas import tpu as pltpu

BN_EPS = 1e-5


def _vmem_budgets():
    """Generation-aware VMEM sizing (v5e/v6e: 128 MiB, v7x: 64 MiB per core)."""
    cap = 64 * 1024 * 1024  # conservative fallback
    try:
        info = pltpu.get_tpu_info()
        cap = int(getattr(info, "vmem_capacity_bytes", cap))
    except Exception:
        pass
    tile_budget = int(cap * 0.30)   # pipelined tiles ~= 30% of physical VMEM
    vmem_limit = int(cap * 0.75)    # scoped limit ~= 75% of physical VMEM
    return cap, tile_budget, vmem_limit


def _maybe_buffered_spec(block_shape, index_map, depth, grid_steps):
    """BlockSpec with deeper pipelining when available & useful; plain otherwise."""
    if grid_steps >= depth + 1:
        try:
            return pl.BlockSpec(block_shape, index_map,
                                pipeline_mode=pl.Buffered(depth))
        except Exception:
            pass
    return pl.BlockSpec(block_shape, index_map)


def _pick_spatial_tile(p, c_in, c_out, x_item, out_item, tile_budget):
    """Largest 128-multiple spatial tile for pass 2 within the VMEM tile budget.

    x tile ~triple-buffered (pl.Buffered(3)), out tile double-buffered; resident
    weight/shift blocks included.  Uses actual per-buffer itemsizes.
    """
    if p < 128:
        return p                                        # full-extent block
    resident = c_out * c_in * x_item + c_out * 4
    per_lane = 3 * c_in * x_item + 2 * c_out * out_item
    for cand in (8192, 4096, 2048, 1024, 512, 256, 128):
        if cand <= p and cand * per_lane + resident <= tile_budget:
            return cand
    return 128


def down_sample_pallas(x, conv_w, gamma, beta, *, stride):
    """x: [N, C_in, H, W] (NCHW).  conv_w: [C_out, C_in, 1, 1].  Returns NCHW."""
    n, c_in, h, w = x.shape
    c_out = conv_w.shape[0]
    ho = (h - 1) // stride + 1
    wo = (w - 1) // stride + 1
    p = ho * wo
    m_total = n * p                                      # BN count per channel
    dtype = x.dtype
    x_item = jnp.dtype(dtype).itemsize

    cap, tile_budget, vmem_limit = _vmem_budgets()

    # 0/1 W-axis selection matrix in the input dtype (exact for bf16/f32).  The
    # appended column is the stride comb, so one MXU matmul yields both the
    # compacted row and its per-channel sum for the BN statistics.
    w_idx = jnp.arange(w)[:, None]
    j_idx = jnp.arange(wo)[None, :]
    sel = (w_idx == j_idx * stride).astype(dtype)                       # [W, Wo]
    sel_aug = jnp.concatenate([sel, jnp.sum(sel, axis=1, keepdims=True)], axis=1)

    # ---- pass 1: strided subsample + compaction + per-image BN statistics ----
    # One full NCHW image per grid step (no XLA gather, no padded copy).  The
    # H-stride is handled by static row indexing into the VMEM tile; the
    # W-stride by the selection matmul.  Per-image partial accumulators keep
    # the batch axis "parallel" (v7x megacore shards it, no init races).
    def compact_stats_kernel(x_ref, sel_ref, xc_ref, sumx_ref, xtx_ref):
        # x_ref:   [1, C_in, H, W]   raw image       sel_ref: [W, Wo+1]
        # xc_ref:  [1, C_in, Ho, Wo] compacted out (x dtype)
        # sumx_ref:[1, C_in, 1]  xtx_ref:[1, C_in, C_in]  per-image partials (f32)
        sumx_ref[...] = jnp.zeros_like(sumx_ref)
        xtx_ref[...] = jnp.zeros_like(xtx_ref)
        s = sel_ref[...]
        for r in range(ho):                               # static unroll
            row = x_ref[0, :, r * stride, :]              # [C_in, W] strided-row read
            xc_aug = jnp.dot(row, s, preferred_element_type=jnp.float32)
            xc = xc_aug[:, :wo].astype(dtype)             # exact copy of selected x
            xc_ref[0, :, r, :] = xc
            sumx_ref[0] += xc_aug[:, wo:wo + 1]           # MXU-produced channel sums
            # NT contraction (last dim of both operands) on the MXU.
            # TODO(synk): confirm no per-row vxpose in the bundle dump; chunk rows
            # into a lane-merged [C_in, R*Wo] operand if XtX ever MXU-binds (v5e).
            xtx_ref[0] += lax.dot_general(
                xc, xc, (((1,), (1,)), ((), ())),
                preferred_element_type=jnp.float32)

    pass1_flops = n * ho * (2 * c_in * w * (wo + 1) + 2 * c_in * c_in * wo)
    pass1_bytes = (x.size * x_item + n * c_in * p * x_item
                   + n * c_in * (c_in + 1) * 4 + sel_aug.size * x_item)
    vmem_needed = 2 * (c_in * h * w * x_item + c_in * p * x_item
                       + c_in * c_in * 4) + (4 << 20)
    vmem_limit_p1 = min(max(vmem_limit, vmem_needed), int(cap * 0.9))
    # TODO(synk): row-chunk pass 1 (grid over H blocks) if a single image ever
    # exceeds the VMEM budget; ResNet downsample shapes are far below it.

    x_c, sumx_part, xtx_part = pl.pallas_call(
        compact_stats_kernel,
        out_shape=(jax.ShapeDtypeStruct((n, c_in, ho, wo), dtype),
                   jax.ShapeDtypeStruct((n, c_in, 1), jnp.float32),
                   jax.ShapeDtypeStruct((n, c_in, c_in), jnp.float32)),
        grid_spec=pltpu.PrefetchScalarGridSpec(
            num_scalar_prefetch=0,
            grid=(n,),
            in_specs=[pl.BlockSpec((1, c_in, h, w), lambda b: (b, 0, 0, 0)),
                      pl.BlockSpec((w, wo + 1), lambda b: (0, 0))],
            out_specs=(pl.BlockSpec((1, c_in, ho, wo), lambda b: (b, 0, 0, 0)),
                       pl.BlockSpec((1, c_in, 1), lambda b: (b, 0, 0)),
                       pl.BlockSpec((1, c_in, c_in), lambda b: (b, 0, 0)))),
        compiler_params=pltpu.CompilerParams(
            dimension_semantics=("parallel",),
            vmem_limit_bytes=vmem_limit_p1),
        cost_estimate=pl.CostEstimate(flops=pass1_flops, transcendentals=0,
                                      bytes_accessed=pass1_bytes),
    )(x, sel_aug)

    # ---- tiny per-channel epilogue: fold BN (training stats) into scale/shift ----
    sum_x = jnp.sum(sumx_part[:, :, 0], axis=0)                       # [C_in]
    xtx = jnp.sum(xtx_part, axis=0)                                   # [C_in, C_in]
    w_mat = conv_w.reshape(c_out, c_in).astype(jnp.float32)
    mean_y = w_mat @ (sum_x / m_total)                                # [C_out]
    ey2 = jnp.einsum('oi,ij,oj->o', w_mat, xtx / m_total, w_mat)      # E[y^2]
    var = jnp.maximum(ey2 - mean_y * mean_y, 0.0)                     # biased batch var
    scale = gamma.astype(jnp.float32) * lax.rsqrt(var + BN_EPS)
    shift = (beta.astype(jnp.float32) - mean_y * scale).reshape(c_out, 1)
    w_scaled = (w_mat * scale[:, None]).astype(dtype)                 # native MXU dtype

    # ---- pass 2: fully-parallel lane-dense GEMM  out = W' @ x_c + shift ----
    x_flat = x_c.reshape(n, c_in, p)          # contiguous -> free reshape, no copy
    tp = _pick_spatial_tile(p, c_in, c_out, x_item, x_item, tile_budget)
    num_pb = pl.cdiv(p, tp)

    def apply_kernel(x_ref, w_ref, shift_ref, o_ref):
        y = lax.dot_general(w_ref[...], x_ref[0], (((1,), (0,)), ((), ())),
                            preferred_element_type=jnp.float32)       # [C_out, TP]
        o_ref[0] = (y + shift_ref[...]).astype(o_ref.dtype)

    pass2_flops = 2 * n * p * c_in * c_out
    pass2_bytes = (x_flat.size * x_item + w_scaled.size * x_item
                   + c_out * 4 + n * c_out * p * x_item)

    out_flat = pl.pallas_call(
        apply_kernel,
        out_shape=jax.ShapeDtypeStruct((n, c_out, p), dtype),
        grid_spec=pltpu.PrefetchScalarGridSpec(
            num_scalar_prefetch=0,
            grid=(n, num_pb),
            in_specs=[_maybe_buffered_spec((1, c_in, tp),
                                           lambda b, pb: (b, 0, pb),
                                           depth=3, grid_steps=n * num_pb),
                      pl.BlockSpec((c_out, c_in), lambda b, pb: (0, 0)),
                      pl.BlockSpec((c_out, 1), lambda b, pb: (0, 0))],
            out_specs=pl.BlockSpec((1, c_out, tp), lambda b, pb: (b, 0, pb))),
        compiler_params=pltpu.CompilerParams(
            dimension_semantics=("parallel", "parallel"),
            vmem_limit_bytes=vmem_limit),
        cost_estimate=pl.CostEstimate(flops=pass2_flops, transcendentals=0,
                                      bytes_accessed=pass2_bytes),
    )(x_flat, w_scaled, shift)

    # No tail slice: output is exactly [N, C_out, P]; reshape to NCHW is free.
    return out_flat.reshape(n, c_out, ho, wo)


def down_sample_ref(x, conv_w, gamma, beta, stride):
    """Pure-JAX reference mirroring PyTorch Conv2d(k=1, stride, bias=False)+BN (train)."""
    x_s = x[:, :, ::stride, ::stride]
    w_mat = conv_w.reshape(conv_w.shape[0], conv_w.shape[1])
    y = jnp.einsum('nchw,oc->nohw', x_s, w_mat)
    mean = jnp.mean(y, axis=(0, 2, 3), keepdims=True)
    var = jnp.mean((y - mean) ** 2, axis=(0, 2, 3), keepdims=True)
    y_hat = (y - mean) / jnp.sqrt(var + BN_EPS)
    return y_hat * gamma.reshape(1, -1, 1, 1) + beta.reshape(1, -1, 1, 1)


if __name__ == "__main__":
    # Small deterministic config consistent with the module's forward.
    N, C_IN, H, W = 2, 4, 16, 16
    C_OUT = 8
    STRIDE = 2

    key = jax.random.PRNGKey(0)
    kx, kw, kg, kb = jax.random.split(key, 4)

    x = jax.random.normal(kx, (N, C_IN, H, W), dtype=jnp.float32)
    conv_w = jax.random.normal(kw, (C_OUT, C_IN, 1, 1), dtype=jnp.float32) * 0.1
    gamma = 1.0 + 0.1 * jax.random.normal(kg, (C_OUT,), dtype=jnp.float32)
    beta = 0.1 * jax.random.normal(kb, (C_OUT,), dtype=jnp.float32)

    fn = jax.jit(down_sample_pallas, static_argnames=("stride",))
    out = jax.block_until_ready(fn(x, conv_w, gamma, beta, stride=STRIDE))

    ref = down_sample_ref(x, conv_w, gamma, beta, STRIDE)
    assert out.shape == (N, C_OUT, H // STRIDE, W // STRIDE), out.shape
    assert jnp.allclose(out, ref, atol=5e-4, rtol=5e-4), "mismatch vs reference"

    print("KERNEL_OK")
</pallas_src>

<mosaic_0001>
module attributes {stable_mosaic.version = 11 : i64} {
  func.func @compact_stats_kernel(%arg0: i32, %arg1: memref<1x4x16x16xf32, #tpu.memory_space<vmem>>, %arg2: memref<16x9xf32, #tpu.memory_space<vmem>>, %arg3: memref<1x4x8x8xf32, #tpu.memory_space<vmem>>, %arg4: memref<1x4x1xf32, #tpu.memory_space<vmem>>, %arg5: memref<1x4x4xf32, #tpu.memory_space<vmem>>) attributes {dimension_semantics = [#tpu.dimension_semantics<parallel>], iteration_bounds = array<i64: 2>, scalar_prefetch = 0 : i64, scratch_operands = 0 : i64, tpu.core_type = #tpu.core_type<tc>, window_params = [{transform_indices = @transform_0, window_bounds = array<i64: 1, 4, 16, 16>}, {pipeline_mode = #tpu.pipeline_mode<synchronous>, transform_indices = @transform_1, window_bounds = array<i64: 16, 9>}, {transform_indices = @transform_2, window_bounds = array<i64: 1, 4, 8, 8>}, {transform_indices = @transform_3, window_bounds = array<i64: 1, 4, 1>}, {transform_indices = @transform_4, window_bounds = array<i64: 1, 4, 4>}]} {
    %cst = arith.constant 0.000000e+00 : f32
    %0 = vector.broadcast %cst : f32 to vector<1x4x1xf32>
    %c0 = arith.constant 0 : index
    %c0_0 = arith.constant 0 : index
    %c0_1 = arith.constant 0 : index
    %1 = vector.load %arg4[%c0, %c0_0, %c0_1] : memref<1x4x1xf32, #tpu.memory_space<vmem>>, vector<1x4x1xf32>
    tpu.vector_store %arg4[%c0, %c0_0, %c0_1], %0 {strides = array<i32>} : memref<1x4x1xf32, #tpu.memory_space<vmem>>, vector<1x4x1xf32>,
    %cst_2 = arith.constant 0.000000e+00 : f32
    %2 = vector.broadcast %cst_2 : f32 to vector<1x4x4xf32>
    %c0_3 = arith.constant 0 : index
    %c0_4 = arith.constant 0 : index
    %c0_5 = arith.constant 0 : index
    %3 = vector.load %arg5[%c0_3, %c0_4, %c0_5] : memref<1x4x4xf32, #tpu.memory_space<vmem>>, vector<1x4x4xf32>
    tpu.vector_store %arg5[%c0_3, %c0_4, %c0_5], %2 {strides = array<i32>} : memref<1x4x4xf32, #tpu.memory_space<vmem>>, vector<1x4x4xf32>,
    %c0_6 = arith.constant 0 : index
    %c0_7 = arith.constant 0 : index
    %4 = vector.load %arg2[%c0_6, %c0_7] : memref<16x9xf32, #tpu.memory_space<vmem>>, vector<16x9xf32>
    %c0_8 = arith.constant 0 : index
    %c0_9 = arith.constant 0 : index
    %c0_10 = arith.constant 0 : index
    %c0_11 = arith.constant 0 : index
    %5 = vector.load %arg1[%c0_8, %c0_9, %c0_10, %c0_11] : memref<1x4x16x16xf32, #tpu.memory_space<vmem>>, vector<1x4x1x16xf32>
    %6 = vector.shape_cast %5 : vector<1x4x1x16xf32> to vector<4x16xf32>
    %cst_12 = arith.constant dense<0.000000e+00> : vector<4x9xf32>
    %7 = tpu.matmul %6, %4, %cst_12 {dimension_numbers = #tpu.dot_dimension_numbers<[1], [0], [0], [1], [0, 0, 1, 1], [], []>} : vector<4x16xf32>, vector<16x9xf32>, vector<4x9xf32> -> vector<4x9xf32>
    %8 = vector.extract_strided_slice %7 {offsets = [0, 0], sizes = [4, 8], strides = [1, 1]} : vector<4x9xf32> to vector<4x8xf32>
    %c0_13 = arith.constant 0 : index
    %c0_14 = arith.constant 0 : index
    %c0_15 = arith.constant 0 : index
    %c0_16 = arith.constant 0 : index
    %9 = vector.load %arg3[%c0_13, %c0_14, %c0_15, %c0_16] : memref<1x4x8x8xf32, #tpu.memory_space<vmem>>, vector<1x4x1x8xf32>
    %10 = vector.shape_cast %9 : vector<1x4x1x8xf32> to vector<4x8xf32>
    %11 = vector.shape_cast %8 : vector<4x8xf32> to vector<1x4x1x8xf32>
    tpu.vector_store %arg3[%c0_13, %c0_14, %c0_15, %c0_16], %11 {strides = array<i32>} : memref<1x4x8x8xf32, #tpu.memory_space<vmem>>, vector<1x4x1x8xf32>,
    %c0_17 = arith.constant 0 : index
    %c0_18 = arith.constant 0 : index
    %c0_19 = arith.constant 0 : index
    %12 = vector.load %arg4[%c0_17, %c0_18, %c0_19] : memref<1x4x1xf32, #tpu.memory_space<vmem>>, vector<1x4x1xf32>
    %13 = vector.shape_cast %12 : vector<1x4x1xf32> to vector<4x1xf32>
    %14 = vector.extract_strided_slice %7 {offsets = [0, 8], sizes = [4, 1], strides = [1, 1]} : vector<4x9xf32> to vector<4x1xf32>
    %15 = arith.addf %13, %14 : vector<4x1xf32>
    %c0_20 = arith.constant 0 : index
    %c0_21 = arith.constant 0 : index
    %c0_22 = arith.constant 0 : index
    %16 = vector.load %arg4[%c0_20, %c0_21, %c0_22] : memref<1x4x1xf32, #tpu.memory_space<vmem>>, vector<1x4x1xf32>
    %17 = vector.shape_cast %16 : vector<1x4x1xf32> to vector<4x1xf32>
    %18 = vector.shape_cast %15 : vector<4x1xf32> to vector<1x4x1xf32>
    tpu.vector_store %arg4[%c0_20, %c0_21, %c0_22], %18 {strides = array<i32>} : memref<1x4x1xf32, #tpu.memory_space<vmem>>, vector<1x4x1xf32>,
    %c0_23 = arith.constant 0 : index
    %c0_24 = arith.constant 0 : index
    %c0_25 = arith.constant 0 : index
    %19 = vector.load %arg5[%c0_23, %c0_24, %c0_25] : memref<1x4x4xf32, #tpu.memory_space<vmem>>, vector<1x4x4xf32>
    %20 = vector.shape_cast %19 : vector<1x4x4xf32> to vector<4x4xf32>
    %cst_26 = arith.constant dense<0.000000e+00> : vector<4x4xf32>
    %21 = tpu.matmul %8, %8, %cst_26 {dimension_numbers = #tpu.dot_dimension_numbers<[1], [1], [0], [0], [0, 0, 1, 0], [], []>} : vector<4x8xf32>, vector<4x8xf32>, vector<4x4xf32> -> vector<4x4xf32>
    %22 = arith.addf %20, %21 : vector<4x4xf32>
    %c0_27 = arith.constant 0 : index
    %c0_28 = arith.constant 0 : index
    %c0_29 = arith.constant 0 : index
    %23 = vector.load %arg5[%c0_27, %c0_28, %c0_29] : memref<1x4x4xf32, #tpu.memory_space<vmem>>, vector<1x4x4xf32>
    %24 = vector.shape_cast %23 : vector<1x4x4xf32> to vector<4x4xf32>
    %25 = vector.shape_cast %22 : vector<4x4xf32> to vector<1x4x4xf32>
    tpu.vector_store %arg5[%c0_27, %c0_28, %c0_29], %25 {strides = array<i32>} : memref<1x4x4xf32, #tpu.memory_space<vmem>>, vector<1x4x4xf32>,
    %c0_30 = arith.constant 0 : index
    %c0_31 = arith.constant 0 : index
    %c2 = arith.constant 2 : index
    %c0_32 = arith.constant 0 : index
    %26 = vector.load %arg1[%c0_30, %c0_31, %c2, %c0_32] : memref<1x4x16x16xf32, #tpu.memory_space<vmem>>, vector<1x4x1x16xf32>
    %27 = vector.shape_cast %26 : vector<1x4x1x16xf32> to vector<4x16xf32>
    %cst_33 = arith.constant dense<0.000000e+00> : vector<4x9xf32>
    %28 = tpu.matmul %27, %4, %cst_33 {dimension_numbers = #tpu.dot_dimension_numbers<[1], [0], [0], [1], [0, 0, 1, 1], [], []>} : vector<4x16xf32>, vector<16x9xf32>, vector<4x9xf32> -> vector<4x9xf32>
    %29 = vector.extract_strided_slice %28 {offsets = [0, 0], sizes = [4, 8], strides = [1, 1]} : vector<4x9xf32> to vector<4x8xf32>
    %c0_34 = arith.constant 0 : index
    %c0_35 = arith.constant 0 : index
    %c1 = arith.constant 1 : index
    %c0_36 = arith.constant 0 : index
    %30 = vector.load %arg3[%c0_34, %c0_35, %c1, %c0_36] : memref<1x4x8x8xf32, #tpu.memory_space<vmem>>, vector<1x4x1x8xf32>
    %31 = vector.shape_cast %30 : vector<1x4x1x8xf32> to vector<4x8xf32>
    %32 = vector.shape_cast %29 : vector<4x8xf32> to vector<1x4x1x8xf32>
    tpu.vector_store %arg3[%c0_34, %c0_35, %c1, %c0_36], %32 {strides = array<i32>} : memref<1x4x8x8xf32, #tpu.memory_space<vmem>>, vector<1x4x1x8xf32>,
    %c0_37 = arith.constant 0 : index
    %c0_38 = arith.constant 0 : index
    %c0_39 = arith.constant 0 : index
    %33 = vector.load %arg4[%c0_37, %c0_38, %c0_39] : memref<1x4x1xf32, #tpu.memory_space<vmem>>, vector<1x4x1xf32>
    %34 = vector.shape_cast %33 : vector<1x4x1xf32> to vector<4x1xf32>
    %35 = vector.extract_strided_slice %28 {offsets = [0, 8], sizes = [4, 1], strides = [1, 1]} : vector<4x9xf32> to vector<4x1xf32>
    %36 = arith.addf %34, %35 : vector<4x1xf32>
    %c0_40 = arith.constant 0 : index
    %c0_41 = arith.constant 0 : index
    %c0_42 = arith.constant 0 : index
    %37 = vector.load %arg4[%c0_40, %c0_41, %c0_42] : memref<1x4x1xf32, #tpu.memory_space<vmem>>, vector<1x4x1xf32>
    %38 = vector.shape_cast %37 : vector<1x4x1xf32> to vector<4x1xf32>
    %39 = vector.shape_cast %36 : vector<4x1xf32> to vector<1x4x1xf32>
    tpu.vector_store %arg4[%c0_40, %c0_41, %c0_42], %39 {strides = array<i32>} : memref<1x4x1xf32, #tpu.memory_space<vmem>>, vector<1x4x1xf32>,
    %c0_43 = arith.constant 0 : index
    %c0_44 = arith.constant 0 : index
    %c0_45 = arith.constant 0 : index
    %40 = vector.load %arg5[%c0_43, %c0_44, %c0_45] : memref<1x4x4xf32, #tpu.memory_space<vmem>>, vector<1x4x4xf32>
    %41 = vector.shape_cast %40 : vector<1x4x4xf32> to vector<4x4xf32>
    %cst_46 = arith.constant dense<0.000000e+00> : vector<4x4xf32>
    %42 = tpu.matmul %29, %29, %cst_46 {dimension_numbers = #tpu.dot_dimension_numbers<[1], [1], [0], [0], [0, 0, 1, 0], [], []>} : vector<4x8xf32>, vector<4x8xf32>, vector<4x4xf32> -> vector<4x4xf32>
    %43 = arith.addf %41, %42 : vector<4x4xf32>
    %c0_47 = arith.constant 0 : index
    %c0_48 = arith.constant 0 : index
    %c0_49 = arith.constant 0 : index
    %44 = vector.load %arg5[%c0_47, %c0_48, %c0_49] : memref<1x4x4xf32, #tpu.memory_space<vmem>>, vector<1x4x4xf32>
    %45 = vector.shape_cast %44 : vector<1x4x4xf32> to vector<4x4xf32>
    %46 = vector.shape_cast %43 : vector<4x4xf32> to vector<1x4x4xf32>
    tpu.vector_store %arg5[%c0_47, %c0_48, %c0_49], %46 {strides = array<i32>} : memref<1x4x4xf32, #tpu.memory_space<vmem>>, vector<1x4x4xf32>,
    %c0_50 = arith.constant 0 : index
    %c0_51 = arith.constant 0 : index
    %c4 = arith.constant 4 : index
    %c0_52 = arith.constant 0 : index
    %47 = vector.load %arg1[%c0_50, %c0_51, %c4, %c0_52] : memref<1x4x16x16xf32, #tpu.memory_space<vmem>>, vector<1x4x1x16xf32>
    %48 = vector.shape_cast %47 : vector<1x4x1x16xf32> to vector<4x16xf32>
    %cst_53 = arith.constant dense<0.000000e+00> : vector<4x9xf32>
    %49 = tpu.matmul %48, %4, %cst_53 {dimension_numbers = #tpu.dot_dimension_numbers<[1], [0], [0], [1], [0, 0, 1, 1], [], []>} : vector<4x16xf32>, vector<16x9xf32>, vector<4x9xf32> -> vector<4x9xf32>
    %50 = vector.extract_strided_slice %49 {offsets = [0, 0], sizes = [4, 8], strides = [1, 1]} : vector<4x9xf32> to vector<4x8xf32>
    %c0_54 = arith.constant 0 : index
    %c0_55 = arith.constant 0 : index
    %c2_56 = arith.constant 2 : index
    %c0_57 = arith.constant 0 : index
    %51 = vector.load %arg3[%c0_54, %c0_55, %c2_56, %c0_57] : memref<1x4x8x8xf32, #tpu.memory_space<vmem>>, vector<1x4x1x8xf32>
    %52 = vector.shape_cast %51 : vector<1x4x1x8xf32> to vector<4x8xf32>
    %53 = vector.shape_cast %50 : vector<4x8xf32> to vector<1x4x1x8xf32>
    tpu.vector_store %arg3[%c0_54, %c0_55, %c2_56, %c0_57], %53 {strides = array<i32>} : memref<1x4x8x8xf32, #tpu.memory_space<vmem>>, vector<1x4x1x8xf32>,
    %c0_58 = arith.constant 0 : index
    %c0_59 = arith.constant 0 : index
    %c0_60 = arith.constant 0 : index
    %54 = vector.load %arg4[%c0_58, %c0_59, %c0_60] : memref<1x4x1xf32, #tpu.memory_space<vmem>>, vector<1x4x1xf32>
    %55 = vector.shape_cast %54 : vector<1x4x1xf32> to vector<4x1xf32>
    %56 = vector.extract_strided_slice %49 {offsets = [0, 8], sizes = [4, 1], strides = [1, 1]} : vector<4x9xf32> to vector<4x1xf32>
    %57 = arith.addf %55, %56 : vector<4x1xf32>
    %c0_61 = arith.constant 0 : index
    %c0_62 = arith.constant 0 : index
    %c0_63 = arith.constant 0 : index
    %58 = vector.load %arg4[%c0_61, %c0_62, %c0_63] : memref<1x4x1xf32, #tpu.memory_space<vmem>>, vector<1x4x1xf32>
    %59 = vector.shape_cast %58 : vector<1x4x1xf32> to vector<4x1xf32>
    %60 = vector.shape_cast %57 : vector<4x1xf32> to vector<1x4x1xf32>
    tpu.vector_store %arg4[%c0_61, %c0_62, %c0_63], %60 {strides = array<i32>} : memref<1x4x1xf32, #tpu.memory_space<vmem>>, vector<1x4x1xf32>,
    %c0_64 = arith.constant 0 : index
    %c0_65 = arith.constant 0 : index
    %c0_66 = arith.constant 0 : index
    %61 = vector.load %arg5[%c0_64, %c0_65, %c0_66] : memref<1x4x4xf32, #tpu.memory_space<vmem>>, vector<1x4x4xf32>
    %62 = vector.shape_cast %61 : vector<1x4x4xf32> to vector<4x4xf32>
    %cst_67 = arith.constant dense<0.000000e+00> : vector<4x4xf32>
    %63 = tpu.matmul %50, %50, %cst_67 {dimension_numbers = #tpu.dot_dimension_numbers<[1], [1], [0], [0], [0, 0, 1, 0], [], []>} : vector<4x8xf32>, vector<4x8xf32>, vector<4x4xf32> -> vector<4x4xf32>
    %64 = arith.addf %62, %63 : vector<4x4xf32>
    %c0_68 = arith.constant 0 : index
    %c0_69 = arith.constant 0 : index
    %c0_70 = arith.constant 0 : index
    %65 = vector.load %arg5[%c0_68, %c0_69, %c0_70] : memref<1x4x4xf32, #tpu.memory_space<vmem>>, vector<1x4x4xf32>
    %66 = vector.shape_cast %65 : vector<1x4x4xf32> to vector<4x4xf32>
    %67 = vector.shape_cast %64 : vector<4x4xf32> to vector<1x4x4xf32>
    tpu.vector_store %arg5[%c0_68, %c0_69, %c0_70], %67 {strides = array<i32>} : memref<1x4x4xf32, #tpu.memory_space<vmem>>, vector<1x4x4xf32>,
    %c0_71 = arith.constant 0 : index
    %c0_72 = arith.constant 0 : index
    %c6 = arith.constant 6 : index
    %c0_73 = arith.constant 0 : index
    %68 = vector.load %arg1[%c0_71, %c0_72, %c6, %c0_73] : memref<1x4x16x16xf32, #tpu.memory_space<vmem>>, vector<1x4x1x16xf32>
    %69 = vector.shape_cast %68 : vector<1x4x1x16xf32> to vector<4x16xf32>
    %cst_74 = arith.constant dense<0.000000e+00> : vector<4x9xf32>
    %70 = tpu.matmul %69, %4, %cst_74 {dimension_numbers = #tpu.dot_dimension_numbers<[1], [0], [0], [1], [0, 0, 1, 1], [], []>} : vector<4x16xf32>, vector<16x9xf32>, vector<4x9xf32> -> vector<4x9xf32>
    %71 = vector.extract_strided_slice %70 {offsets = [0, 0], sizes = [4, 8], strides = [1, 1]} : vector<4x9xf32> to vector<4x8xf32>
    %c0_75 = arith.constant 0 : index
    %c0_76 = arith.constant 0 : index
    %c3 = arith.constant 3 : index
    %c0_77 = arith.constant 0 : index
    %72 = vector.load %arg3[%c0_75, %c0_76, %c3, %c0_77] : memref<1x4x8x8xf32, #tpu.memory_space<vmem>>, vector<1x4x1x8xf32>
    %73 = vector.shape_cast %72 : vector<1x4x1x8xf32> to vector<4x8xf32>
    %74 = vector.shape_cast %71 : vector<4x8xf32> to vector<1x4x1x8xf32>
    tpu.vector_store %arg3[%c0_75, %c0_76, %c3, %c0_77], %74 {strides = array<i32>} : memref<1x4x8x8xf32, #tpu.memory_space<vmem>>, vector<1x4x1x8xf32>,
    %c0_78 = arith.constant 0 : index
    %c0_79 = arith.constant 0 : index
    %c0_80 = arith.constant 0 : index
    %75 = vector.load %arg4[%c0_78, %c0_79, %c0_80] : memref<1x4x1xf32, #tpu.memory_space<vmem>>, vector<1x4x1xf32>
    %76 = vector.shape_cast %75 : vector<1x4x1xf32> to vector<4x1xf32>
    %77 = vector.extract_strided_slice %70 {offsets = [0, 8], sizes = [4, 1], strides = [1, 1]} : vector<4x9xf32> to vector<4x1xf32>
    %78 = arith.addf %76, %77 : vector<4x1xf32>
    %c0_81 = arith.constant 0 : index
    %c0_82 = arith.constant 0 : index
    %c0_83 = arith.constant 0 : index
    %79 = vector.load %arg4[%c0_81, %c0_82, %c0_83] : memref<1x4x1xf32, #tpu.memory_space<vmem>>, vector<1x4x1xf32>
    %80 = vector.shape_cast %79 : vector<1x4x1xf32> to vector<4x1xf32>
    %81 = vector.shape_cast %78 : vector<4x1xf32> to vector<1x4x1xf32>
    tpu.vector_store %arg4[%c0_81, %c0_82, %c0_83], %81 {strides = array<i32>} : memref<1x4x1xf32, #tpu.memory_space<vmem>>, vector<1x4x1xf32>,
    %c0_84 = arith.constant 0 : index
    %c0_85 = arith.constant 0 : index
    %c0_86 = arith.constant 0 : index
    %82 = vector.load %arg5[%c0_84, %c0_85, %c0_86] : memref<1x4x4xf32, #tpu.memory_space<vmem>>, vector<1x4x4xf32>
    %83 = vector.shape_cast %82 : vector<1x4x4xf32> to vector<4x4xf32>
    %cst_87 = arith.constant dense<0.000000e+00> : vector<4x4xf32>
    %84 = tpu.matmul %71, %71, %cst_87 {dimension_numbers = #tpu.dot_dimension_numbers<[1], [1], [0], [0], [0, 0, 1, 0], [], []>} : vector<4x8xf32>, vector<4x8xf32>, vector<4x4xf32> -> vector<4x4xf32>
    %85 = arith.addf %83, %84 : vector<4x4xf32>
    %c0_88 = arith.constant 0 : index
    %c0_89 = arith.constant 0 : index
    %c0_90 = arith.constant 0 : index
    %86 = vector.load %arg5[%c0_88, %c0_89, %c0_90] : memref<1x4x4xf32, #tpu.memory_space<vmem>>, vector<1x4x4xf32>
    %87 = vector.shape_cast %86 : vector<1x4x4xf32> to vector<4x4xf32>
    %88 = vector.shape_cast %85 : vector<4x4xf32> to vector<1x4x4xf32>
    tpu.vector_store %arg5[%c0_88, %c0_89, %c0_90], %88 {strides = array<i32>} : memref<1x4x4xf32, #tpu.memory_space<vmem>>, vector<1x4x4xf32>,
    %c0_91 = arith.constant 0 : index
    %c0_92 = arith.constant 0 : index
    %c8 = arith.constant 8 : index
    %c0_93 = arith.constant 0 : index
    %89 = vector.load %arg1[%c0_91, %c0_92, %c8, %c0_93] : memref<1x4x16x16xf32, #tpu.memory_space<vmem>>, vector<1x4x1x16xf32>
    %90 = vector.shape_cast %89 : vector<1x4x1x16xf32> to vector<4x16xf32>
    %cst_94 = arith.constant dense<0.000000e+00> : vector<4x9xf32>
    %91 = tpu.matmul %90, %4, %cst_94 {dimension_numbers = #tpu.dot_dimension_numbers<[1], [0], [0], [1], [0, 0, 1, 1], [], []>} : vector<4x16xf32>, vector<16x9xf32>, vector<4x9xf32> -> vector<4x9xf32>
    %92 = vector.extract_strided_slice %91 {offsets = [0, 0], sizes = [4, 8], strides = [1, 1]} : vector<4x9xf32> to vector<4x8xf32>
    %c0_95 = arith.constant 0 : index
    %c0_96 = arith.constant 0 : index
    %c4_97 = arith.constant 4 : index
    %c0_98 = arith.constant 0 : index
    %93 = vector.load %arg3[%c0_95, %c0_96, %c4_97, %c0_98] : memref<1x4x8x8xf32, #tpu.memory_space<vmem>>, vector<1x4x1x8xf32>
    %94 = vector.shape_cast %93 : vector<1x4x1x8xf32> to vector<4x8xf32>
    %95 = vector.shape_cast %92 : vector<4x8xf32> to vector<1x4x1x8xf32>
    tpu.vector_store %arg3[%c0_95, %c0_96, %c4_97, %c0_98], %95 {strides = array<i32>} : memref<1x4x8x8xf32, #tpu.memory_space<vmem>>, vector<1x4x1x8xf32>,
    %c0_99 = arith.constant 0 : index
    %c0_100 = arith.constant 0 : index
    %c0_101 = arith.constant 0 : index
    %96 = vector.load %arg4[%c0_99, %c0_100, %c0_101] : memref<1x4x1xf32, #tpu.memory_space<vmem>>, vector<1x4x1xf32>
    %97 = vector.shape_cast %96 : vector<1x4x1xf32> to vector<4x1xf32>
    %98 = vector.extract_strided_slice %91 {offsets = [0, 8], sizes = [4, 1], strides = [1, 1]} : vector<4x9xf32> to vector<4x1xf32>
    %99 = arith.addf %97, %98 : vector<4x1xf32>
    %c0_102 = arith.constant 0 : index
    %c0_103 = arith.constant 0 : index
    %c0_104 = arith.constant 0 : index
    %100 = vector.load %arg4[%c0_102, %c0_103, %c0_104] : memref<1x4x1xf32, #tpu.memory_space<vmem>>, vector<1x4x1xf32>
    %101 = vector.shape_cast %100 : vector<1x4x1xf32> to vector<4x1xf32>
    %102 = vector.shape_cast %99 : vector<4x1xf32> to vector<1x4x1xf32>
    tpu.vector_store %arg4[%c0_102, %c0_103, %c0_104], %102 {strides = array<i32>} : memref<1x4x1xf32, #tpu.memory_space<vmem>>, vector<1x4x1xf32>,
    %c0_105 = arith.constant 0 : index
    %c0_106 = arith.constant 0 : index
    %c0_107 = arith.constant 0 : index
    %103 = vector.load %arg5[%c0_105, %c0_106, %c0_107] : memref<1x4x4xf32, #tpu.memory_space<vmem>>, vector<1x4x4xf32>
    %104 = vector.shape_cast %103 : vector<1x4x4xf32> to vector<4x4xf32>
    %cst_108 = arith.constant dense<0.000000e+00> : vector<4x4xf32>
    %105 = tpu.matmul %92, %92, %cst_108 {dimension_numbers = #tpu.dot_dimension_numbers<[1], [1], [0], [0], [0, 0, 1, 0], [], []>} : vector<4x8xf32>, vector<4x8xf32>, vector<4x4xf32> -> vector<4x4xf32>
    %106 = arith.addf %104, %105 : vector<4x4xf32>
    %c0_109 = arith.constant 0 : index
    %c0_110 = arith.constant 0 : index
    %c0_111 = arith.constant 0 : index
    %107 = vector.load %arg5[%c0_109, %c0_110, %c0_111] : memref<1x4x4xf32, #tpu.memory_space<vmem>>, vector<1x4x4xf32>
    %108 = vector.shape_cast %107 : vector<1x4x4xf32> to vector<4x4xf32>
    %109 = vector.shape_cast %106 : vector<4x4xf32> to vector<1x4x4xf32>
    tpu.vector_store %arg5[%c0_109, %c0_110, %c0_111], %109 {strides = array<i32>} : memref<1x4x4xf32, #tpu.memory_space<vmem>>, vector<1x4x4xf32>,
    %c0_112 = arith.constant 0 : index
    %c0_113 = arith.constant 0 : index
    %c10 = arith.constant 10 : index
    %c0_114 = arith.constant 0 : index
    %110 = vector.load %arg1[%c0_112, %c0_113, %c10, %c0_114] : memref<1x4x16x16xf32, #tpu.memory_space<vmem>>, vector<1x4x1x16xf32>
    %111 = vector.shape_cast %110 : vector<1x4x1x16xf32> to vector<4x16xf32>
    %cst_115 = arith.constant dense<0.000000e+00> : vector<4x9xf32>
    %112 = tpu.matmul %111, %4, %cst_115 {dimension_numbers = #tpu.dot_dimension_numbers<[1], [0], [0], [1], [0, 0, 1, 1], [], []>} : vector<4x16xf32>, vector<16x9xf32>, vector<4x9xf32> -> vector<4x9xf32>
    %113 = vector.extract_strided_slice %112 {offsets = [0, 0], sizes = [4, 8], strides = [1, 1]} : vector<4x9xf32> to vector<4x8xf32>
    %c0_116 = arith.constant 0 : index
    %c0_117 = arith.constant 0 : index
    %c5 = arith.constant 5 : index
    %c0_118 = arith.constant 0 : index
    %114 = vector.load %arg3[%c0_116, %c0_117, %c5, %c0_118] : memref<1x4x8x8xf32, #tpu.memory_space<vmem>>, vector<1x4x1x8xf32>
    %115 = vector.shape_cast %114 : vector<1x4x1x8xf32> to vector<4x8xf32>
    %116 = vector.shape_cast %113 : vector<4x8xf32> to vector<1x4x1x8xf32>
    tpu.vector_store %arg3[%c0_116, %c0_117, %c5, %c0_118], %116 {strides = array<i32>} : memref<1x4x8x8xf32, #tpu.memory_space<vmem>>, vector<1x4x1x8xf32>,
    %c0_119 = arith.constant 0 : index
    %c0_120 = arith.constant 0 : index
    %c0_121 = arith.constant 0 : index
    %117 = vector.load %arg4[%c0_119, %c0_120, %c0_121] : memref<1x4x1xf32, #tpu.memory_space<vmem>>, vector<1x4x1xf32>
    %118 = vector.shape_cast %117 : vector<1x4x1xf32> to vector<4x1xf32>
    %119 = vector.extract_strided_slice %112 {offsets = [0, 8], sizes = [4, 1], strides = [1, 1]} : vector<4x9xf32> to vector<4x1xf32>
    %120 = arith.addf %118, %119 : vector<4x1xf32>
    %c0_122 = arith.constant 0 : index
    %c0_123 = arith.constant 0 : index
    %c0_124 = arith.constant 0 : index
    %121 = vector.load %arg4[%c0_122, %c0_123, %c0_124] : memref<1x4x1xf32, #tpu.memory_space<vmem>>, vector<1x4x1xf32>
    %122 = vector.shape_cast %121 : vector<1x4x1xf32> to vector<4x1xf32>
    %123 = vector.shape_cast %120 : vector<4x1xf32> to vector<1x4x1xf32>
    tpu.vector_store %arg4[%c0_122, %c0_123, %c0_124], %123 {strides = array<i32>} : memref<1x4x1xf32, #tpu.memory_space<vmem>>, vector<1x4x1xf32>,
    %c0_125 = arith.constant 0 : index
    %c0_126 = arith.constant 0 : index
    %c0_127 = arith.constant 0 : index
    %124 = vector.load %arg5[%c0_125, %c0_126, %c0_127] : memref<1x4x4xf32, #tpu.memory_space<vmem>>, vector<1x4x4xf32>
    %125 = vector.shape_cast %124 : vector<1x4x4xf32> to vector<4x4xf32>
    %cst_128 = arith.constant dense<0.000000e+00> : vector<4x4xf32>
    %126 = tpu.matmul %113, %113, %cst_128 {dimension_numbers = #tpu.dot_dimension_numbers<[1], [1], [0], [0], [0, 0, 1, 0], [], []>} : vector<4x8xf32>, vector<4x8xf32>, vector<4x4xf32> -> vector<4x4xf32>
    %127 = arith.addf %125, %126 : vector<4x4xf32>
    %c0_129 = arith.constant 0 : index
    %c0_130 = arith.constant 0 : index
    %c0_131 = arith.constant 0 : index
    %128 = vector.load %arg5[%c0_129, %c0_130, %c0_131] : memref<1x4x4xf32, #tpu.memory_space<vmem>>, vector<1x4x4xf32>
    %129 = vector.shape_cast %128 : vector<1x4x4xf32> to vector<4x4xf32>
    %130 = vector.shape_cast %127 : vector<4x4xf32> to vector<1x4x4xf32>
    tpu.vector_store %arg5[%c0_129, %c0_130, %c0_131], %130 {strides = array<i32>} : memref<1x4x4xf32, #tpu.memory_space<vmem>>, vector<1x4x4xf32>,
    %c0_132 = arith.constant 0 : index
    %c0_133 = arith.constant 0 : index
    %c12 = arith.constant 12 : index
    %c0_134 = arith.constant 0 : index
    %131 = vector.load %arg1[%c0_132, %c0_133, %c12, %c0_134] : memref<1x4x16x16xf32, #tpu.memory_space<vmem>>, vector<1x4x1x16xf32>
    %132 = vector.shape_cast %131 : vector<1x4x1x16xf32> to vector<4x16xf32>
    %cst_135 = arith.constant dense<0.000000e+00> : vector<4x9xf32>
    %133 = tpu.matmul %132, %4, %cst_135 {dimension_numbers = #tpu.dot_dimension_numbers<[1], [0], [0], [1], [0, 0, 1, 1], [], []>} : vector<4x16xf32>, vector<16x9xf32>, vector<4x9xf32> -> vector<4x9xf32>
    %134 = vector.extract_strided_slice %133 {offsets = [0, 0], sizes = [4, 8], strides = [1, 1]} : vector<4x9xf32> to vector<4x8xf32>
    %c0_136 = arith.constant 0 : index
    %c0_137 = arith.constant 0 : index
    %c6_138 = arith.constant 6 : index
    %c0_139 = arith.constant 0 : index
    %135 = vector.load %arg3[%c0_136, %c0_137, %c6_138, %c0_139] : memref<1x4x8x8xf32, #tpu.memory_space<vmem>>, vector<1x4x1x8xf32>
    %136 = vector.shape_cast %135 : vector<1x4x1x8xf32> to vector<4x8xf32>
    %137 = vector.shape_cast %134 : vector<4x8xf32> to vector<1x4x1x8xf32>
    tpu.vector_store %arg3[%c0_136, %c0_137, %c6_138, %c0_139], %137 {strides = array<i32>} : memref<1x4x8x8xf32, #tpu.memory_space<vmem>>, vector<1x4x1x8xf32>,
    %c0_140 = arith.constant 0 : index
    %c0_141 = arith.constant 0 : index
    %c0_142 = arith.constant 0 : index
    %138 = vector.load %arg4[%c0_140, %c0_141, %c0_142] : memref<1x4x1xf32, #tpu.memory_space<vmem>>, vector<1x4x1xf32>
    %139 = vector.shape_cast %138 : vector<1x4x1xf32> to vector<4x1xf32>
    %140 = vector.extract_strided_slice %133 {offsets = [0, 8], sizes = [4, 1], strides = [1, 1]} : vector<4x9xf32> to vector<4x1xf32>
    %141 = arith.addf %139, %140 : vector<4x1xf32>
    %c0_143 = arith.constant 0 : index
    %c0_144 = arith.constant 0 : index
    %c0_145 = arith.constant 0 : index
    %142 = vector.load %arg4[%c0_143, %c0_144, %c0_145] : memref<1x4x1xf32, #tpu.memory_space<vmem>>, vector<1x4x1xf32>
    %143 = vector.shape_cast %142 : vector<1x4x1xf32> to vector<4x1xf32>
    %144 = vector.shape_cast %141 : vector<4x1xf32> to vector<1x4x1xf32>
    tpu.vector_store %arg4[%c0_143, %c0_144, %c0_145], %144 {strides = array<i32>} : memref<1x4x1xf32, #tpu.memory_space<vmem>>, vector<1x4x1xf32>,
    %c0_146 = arith.constant 0 : index
    %c0_147 = arith.constant 0 : index
    %c0_148 = arith.constant 0 : index
    %145 = vector.load %arg5[%c0_146, %c0_147, %c0_148] : memref<1x4x4xf32, #tpu.memory_space<vmem>>, vector<1x4x4xf32>
    %146 = vector.shape_cast %145 : vector<1x4x4xf32> to vector<4x4xf32>
    %cst_149 = arith.constant dense<0.000000e+00> : vector<4x4xf32>
    %147 = tpu.matmul %134, %134, %cst_149 {dimension_numbers = #tpu.dot_dimension_numbers<[1], [1], [0], [0], [0, 0, 1, 0], [], []>} : vector<4x8xf32>, vector<4x8xf32>, vector<4x4xf32> -> vector<4x4xf32>
    %148 = arith.addf %146, %147 : vector<4x4xf32>
    %c0_150 = arith.constant 0 : index
    %c0_151 = arith.constant 0 : index
    %c0_152 = arith.constant 0 : index
    %149 = vector.load %arg5[%c0_150, %c0_151, %c0_152] : memref<1x4x4xf32, #tpu.memory_space<vmem>>, vector<1x4x4xf32>
    %150 = vector.shape_cast %149 : vector<1x4x4xf32> to vector<4x4xf32>
    %151 = vector.shape_cast %148 : vector<4x4xf32> to vector<1x4x4xf32>
    tpu.vector_store %arg5[%c0_150, %c0_151, %c0_152], %151 {strides = array<i32>} : memref<1x4x4xf32, #tpu.memory_space<vmem>>, vector<1x4x4xf32>,
    %c0_153 = arith.constant 0 : index
    %c0_154 = arith.constant 0 : index
    %c14 = arith.constant 14 : index
    %c0_155 = arith.constant 0 : index
    %152 = vector.load %arg1[%c0_153, %c0_154, %c14, %c0_155] : memref<1x4x16x16xf32, #tpu.memory_space<vmem>>, vector<1x4x1x16xf32>
    %153 = vector.shape_cast %152 : vector<1x4x1x16xf32> to vector<4x16xf32>
    %cst_156 = arith.constant dense<0.000000e+00> : vector<4x9xf32>
    %154 = tpu.matmul %153, %4, %cst_156 {dimension_numbers = #tpu.dot_dimension_numbers<[1], [0], [0], [1], [0, 0, 1, 1], [], []>} : vector<4x16xf32>, vector<16x9xf32>, vector<4x9xf32> -> vector<4x9xf32>
    %155 = vector.extract_strided_slice %154 {offsets = [0, 0], sizes = [4, 8], strides = [1, 1]} : vector<4x9xf32> to vector<4x8xf32>
    %c0_157 = arith.constant 0 : index
    %c0_158 = arith.constant 0 : index
    %c7 = arith.constant 7 : index
    %c0_159 = arith.constant 0 : index
    %156 = vector.load %arg3[%c0_157, %c0_158, %c7, %c0_159] : memref<1x4x8x8xf32, #tpu.memory_space<vmem>>, vector<1x4x1x8xf32>
    %157 = vector.shape_cast %156 : vector<1x4x1x8xf32> to vector<4x8xf32>
    %158 = vector.shape_cast %155 : vector<4x8xf32> to vector<1x4x1x8xf32>
    tpu.vector_store %arg3[%c0_157, %c0_158, %c7, %c0_159], %158 {strides = array<i32>} : memref<1x4x8x8xf32, #tpu.memory_space<vmem>>, vector<1x4x1x8xf32>,
    %c0_160 = arith.constant 0 : index
    %c0_161 = arith.constant 0 : index
    %c0_162 = arith.constant 0 : index
    %159 = vector.load %arg4[%c0_160, %c0_161, %c0_162] : memref<1x4x1xf32, #tpu.memory_space<vmem>>, vector<1x4x1xf32>
    %160 = vector.shape_cast %159 : vector<1x4x1xf32> to vector<4x1xf32>
    %161 = vector.extract_strided_slice %154 {offsets = [0, 8], sizes = [4, 1], strides = [1, 1]} : vector<4x9xf32> to vector<4x1xf32>
    %162 = arith.addf %160, %161 : vector<4x1xf32>
    %c0_163 = arith.constant 0 : index
    %c0_164 = arith.constant 0 : index
    %c0_165 = arith.constant 0 : index
    %163 = vector.load %arg4[%c0_163, %c0_164, %c0_165] : memref<1x4x1xf32, #tpu.memory_space<vmem>>, vector<1x4x1xf32>
    %164 = vector.shape_cast %163 : vector<1x4x1xf32> to vector<4x1xf32>
    %165 = vector.shape_cast %162 : vector<4x1xf32> to vector<1x4x1xf32>
    tpu.vector_store %arg4[%c0_163, %c0_164, %c0_165], %165 {strides = array<i32>} : memref<1x4x1xf32, #tpu.memory_space<vmem>>, vector<1x4x1xf32>,
    %c0_166 = arith.constant 0 : index
    %c0_167 = arith.constant 0 : index
    %c0_168 = arith.constant 0 : index
    %166 = vector.load %arg5[%c0_166, %c0_167, %c0_168] : memref<1x4x4xf32, #tpu.memory_space<vmem>>, vector<1x4x4xf32>
    %167 = vector.shape_cast %166 : vector<1x4x4xf32> to vector<4x4xf32>
    %cst_169 = arith.constant dense<0.000000e+00> : vector<4x4xf32>
    %168 = tpu.matmul %155, %155, %cst_169 {dimension_numbers = #tpu.dot_dimension_numbers<[1], [1], [0], [0], [0, 0, 1, 0], [], []>} : vector<4x8xf32>, vector<4x8xf32>, vector<4x4xf32> -> vector<4x4xf32>
    %169 = arith.addf %167, %168 : vector<4x4xf32>
    %c0_170 = arith.constant 0 : index
    %c0_171 = arith.constant 0 : index
    %c0_172 = arith.constant 0 : index
    %170 = vector.load %arg5[%c0_170, %c0_171, %c0_172] : memref<1x4x4xf32, #tpu.memory_space<vmem>>, vector<1x4x4xf32>
    %171 = vector.shape_cast %170 : vector<1x4x4xf32> to vector<4x4xf32>
    %172 = vector.shape_cast %169 : vector<4x4xf32> to vector<1x4x4xf32>
    tpu.vector_store %arg5[%c0_170, %c0_171, %c0_172], %172 {strides = array<i32>} : memref<1x4x4xf32, #tpu.memory_space<vmem>>, vector<1x4x4xf32>,
    return
  }
  func.func @transform_0(%arg0: i32) -> (i32, i32, i32, i32) {
    %c0_i32 = arith.constant 0 : i32
    %c0_i32_0 = arith.constant 0 : i32
    %c0_i32_1 = arith.constant 0 : i32
    %c0_i32_2 = arith.constant 0 : i32
    return %arg0, %c0_i32, %c0_i32_0, %c0_i32_1 : i32, i32, i32, i32
  }
  func.func @transform_1(%arg0: i32) -> (i32, i32) {
    %c0_i32 = arith.constant 0 : i32
    %c0_i32_0 = arith.constant 0 : i32
    %c0_i32_1 = arith.constant 0 : i32
    return %c0_i32, %c0_i32_0 : i32, i32
  }
  func.func @transform_2(%arg0: i32) -> (i32, i32, i32, i32) {
    %c0_i32 = arith.constant 0 : i32
    %c0_i32_0 = arith.constant 0 : i32
    %c0_i32_1 = arith.constant 0 : i32
    %c0_i32_2 = arith.constant 0 : i32
    return %arg0, %c0_i32, %c0_i32_0, %c0_i32_1 : i32, i32, i32, i32
  }
  func.func @transform_3(%arg0: i32) -> (i32, i32, i32) {
    %c0_i32 = arith.constant 0 : i32
    %c0_i32_0 = arith.constant 0 : i32
    %c0_i32_1 = arith.constant 0 : i32
    return %arg0, %c0_i32, %c0_i32_0 : i32, i32, i32
  }
  func.func @transform_4(%arg0: i32) -> (i32, i32, i32) {
    %c0_i32 = arith.constant 0 : i32
    %c0_i32_0 = arith.constant 0 : i32
    %c0_i32_1 = arith.constant 0 : i32
    return %arg0, %c0_i32, %c0_i32_0 : i32, i32, i32
  }
}

module attributes {stable_mosaic.version = 11 : i64} {
  func.func @apply_kernel(%arg0: i32, %arg1: i32, %arg2: memref<1x4x64xf32, #tpu.memory_space<vmem>>, %arg3: memref<8x4xf32, #tpu.memory_space<vmem>>, %arg4: memref<8x1xf32, #tpu.memory_space<vmem>>, %arg5: memref<1x8x64xf32, #tpu.memory_space<vmem>>) attributes {dimension_semantics = [#tpu.dimension_semantics<parallel>, #tpu.dimension_semantics<parallel>], iteration_bounds = array<i64: 2, 1>, scalar_prefetch = 0 : i64, scratch_operands = 0 : i64, tpu.core_type = #tpu.core_type<tc>, window_params = [{transform_indices = @transform_0, window_bounds = array<i64: 1, 4, 64>}, {pipeline_mode = #tpu.pipeline_mode<synchronous>, transform_indices = @transform_1, window_bounds = array<i64: 8, 4>}, {pipeline_mode = #tpu.pipeline_mode<synchronous>, transform_indices = @transform_2, window_bounds = array<i64: 8, 1>}, {transform_indices = @transform_3, window_bounds = array<i64: 1, 8, 64>}]} {
    %c0 = arith.constant 0 : index
    %c0_0 = arith.constant 0 : index
    %0 = vector.load %arg3[%c0, %c0_0] : memref<8x4xf32, #tpu.memory_space<vmem>>, vector<8x4xf32>
    %c0_1 = arith.constant 0 : index
    %c0_2 = arith.constant 0 : index
    %c0_3 = arith.constant 0 : index
    %1 = vector.load %arg2[%c0_1, %c0_2, %c0_3] : memref<1x4x64xf32, #tpu.memory_space<vmem>>, vector<1x4x64xf32>
    %2 = vector.shape_cast %1 : vector<1x4x64xf32> to vector<4x64xf32>
    %cst = arith.constant dense<0.000000e+00> : vector<8x64xf32>
    %3 = tpu.matmul %0, %2, %cst {dimension_numbers = #tpu.dot_dimension_numbers<[1], [0], [0], [1], [0, 0, 1, 1], [], []>} : vector<8x4xf32>, vector<4x64xf32>, vector<8x64xf32> -> vector<8x64xf32>
    %c0_4 = arith.constant 0 : index
    %c0_5 = arith.constant 0 : index
    %4 = vector.load %arg4[%c0_4, %c0_5] : memref<8x1xf32, #tpu.memory_space<vmem>>, vector<8x1xf32>
    %5 = vector.broadcast %4 : vector<8x1xf32> to vector<8x64xf32>
    %6 = arith.addf %3, %5 : vector<8x64xf32>
    %c0_6 = arith.constant 0 : index
    %c0_7 = arith.constant 0 : index
    %c0_8 = arith.constant 0 : index
    %7 = vector.load %arg5[%c0_6, %c0_7, %c0_8] : memref<1x8x64xf32, #tpu.memory_space<vmem>>, vector<1x8x64xf32>
    %8 = vector.shape_cast %7 : vector<1x8x64xf32> to vector<8x64xf32>
    %9 = vector.shape_cast %6 : vector<8x64xf32> to vector<1x8x64xf32>
    tpu.vector_store %arg5[%c0_6, %c0_7, %c0_8], %9 {strides = array<i32>} : memref<1x8x64xf32, #tpu.memory_space<vmem>>, vector<1x8x64xf32>,
    return
  }
  func.func @transform_0(%arg0: i32, %arg1: i32) -> (i32, i32, i32) {
    %c0_i32 = arith.constant 0 : i32
    %c0_i32_0 = arith.constant 0 : i32
    return %arg0, %c0_i32, %arg1 : i32, i32, i32
  }
  func.func @transform_1(%arg0: i32, %arg1: i32) -> (i32, i32) {
    %c0_i32 = arith.constant 0 : i32
    %c0_i32_0 = arith.constant 0 : i32
    %c0_i32_1 = arith.constant 0 : i32
    return %c0_i32, %c0_i32_0 : i32, i32
  }
  func.func @transform_2(%arg0: i32, %arg1: i32) -> (i32, i32) {
    %c0_i32 = arith.constant 0 : i32
    %c0_i32_0 = arith.constant 0 : i32
    %c0_i32_1 = arith.constant 0 : i32
    return %c0_i32, %c0_i32_0 : i32, i32
  }
  func.func @transform_3(%arg0: i32, %arg1: i32) -> (i32, i32, i32) {
    %c0_i32 = arith.constant 0 : i32
    %c0_i32_0 = arith.constant 0 : i32
    return %arg0, %c0_i32, %arg1 : i32, i32, i32
  }
}

</mosaic_0001>

<llo_original>
// kernel: down_sample_pallas.3
$region0: #{down_sample_pallas.3}
  #allocation0 [shape = 'u32[]', space=smem, size = 0x4, offset = 0x4, fixed_abs, tag = 'smem constant byte address 0x4 - core index']
  #allocation1 [shape = 'u32[144,128]{1,0:T(1,128)}', space=vmem, size = 0x12000, scoped, tag = 'internal scratch']
  %s0 = inlined_call_operand.vmem [shape: f32[2,4,64], index: 0, kind: input, shape index: {}]
  %s1 = inlined_call_operand.vmem [shape: f32[8,4], index: 1, kind: input, shape index: {}]
  %s2 = inlined_call_operand.vmem [shape: f32[8,1], index: 2, kind: input, shape index: {}]
  %s3 = inlined_call_operand.vmem [shape: f32[2,8,64], index: 3, kind: output, shape index: {}]
  %s4 = sld [smem:[#allocation0]]
  $region45: #{down_sample_pallas.3} parent=0
    _
  %s6 = ssub.s32 1, %s4
  %s7 = scalar_select 0, %s6, %s4
  loop: start=0, step=1, limit=4
  $region2: #{down_sample_pallas.3} parent=0 // loop_pre_header
    _
  $region3: #{down_sample_pallas.3} parent=0 // loop_header
    %s9 = sphi 0, %s13
    %p10 = scmp.ge.s32.totalorder %s9, 4
    %s16 = sphi 0, %s28
    %s17 = sphi 0, %s24
    %s18 = sphi 0, %s16
    %s19 = sphi 0, %s17
    %s20 = sphi 0, %s18
    %s21 = sphi 0, %s19
    %s33 = sphi 0, %s35
    %s36 = sphi 0, %s33
    %s37 = sphi 0, %s36
    %s53 = sphi 0, %s37
    %s57 = sphi 0, %s57
    %s59 = sphi 0, %s57
    %s60 = sphi 0, %s59
    %s74 = sphi 0, %s60
    %s78 = sphi 0, %s78
    %s80 = sphi 0, %s78
    %s81 = sphi 0, %s80
    %s95 = sphi 0, %s81
    %s103 = sphi 0, %s105
    %s106 = sphi 0, %s103
    %s107 = sphi 0, %s106
    %s123 = sphi 0, %s107
  $region4: #{down_sample_pallas.3} parent=0 // loop_header_branch
    %12 = sbr.rel (%p10) target = $region8
  $region5: #{down_sample_pallas.3} parent=0 // loop_body
    %s14 = ssub.s32 %s9, 1
    %s15 = ssub.s32 %s9, 2
    %s22 = sadd.s32 1, %s17
    %p23 = scmp.ge.s32.totalorder %s22, 1
    %s24 = scalar_select %p23, 0, %s22
    %s25 = sadd.s32 1, %s16
    %s26 = scalar_select %p23, %s25, %s16
    %p27 = scmp.ge.s32.totalorder %s26, 2
    %s28 = scalar_select %p27, 0, %s26
    %s29 = ssub.s32 %s16, %s28
    %s30 = ssub.s32 %s17, %s24
    %s31 = sor.u32 %s29, %s30
    %p32 = scmp.eq.s32.totalorder %s31, 0
    %s34 = sadd.s32 %s33, 1
    %s35 = scalar_select %p32, %s33, %s34
    %p38 = pneg %p32
    %p39 = scmp.eq.s32.totalorder %s9, 1
    %p40 = por %p38, %p39
    %p41 = scmp.ne.s32.totalorder %s33, %s36
    %p42 = scmp.eq.s32.totalorder %s9, 0
    %p43 = por %p41, %p42
    %p44 = scmp.ne.s32.totalorder %s33, %s36
    %p45 = scmp.eq.s32.totalorder %s14, 1
    %p46 = por %p44, %p45
    %p47 = scmp.ne.s32.totalorder %s36, %s37
    %p48 = scmp.eq.s32.totalorder %s14, 0
    %p49 = por %p47, %p48
    %p50 = scmp.ne.s32.totalorder %s36, %s37
    %p51 = scmp.eq.s32.totalorder %s15, 1
    %p52 = por %p50, %p51
    %p54 = scmp.ne.s32.totalorder %s37, %s53
    %p55 = scmp.eq.s32.totalorder %s15, 0
    %p56 = por %p54, %p55
    %s58 = sadd.s32 %s57, 1
    %p61 = scmp.eq.s32.totalorder %s9, 1
    %p62 = scmp.ne.s32.totalorder %s57, %s59
    %p63 = scmp.eq.s32.totalorder %s9, 0
    %p64 = por %p62, %p63
    %p65 = scmp.ne.s32.totalorder %s57, %s59
    %p66 = scmp.eq.s32.totalorder %s14, 1
    %p67 = por %p65, %p66
    %p68 = scmp.ne.s32.totalorder %s59, %s60
    %p69 = scmp.eq.s32.totalorder %s14, 0
    %p70 = por %p68, %p69
    %p71 = scmp.ne.s32.totalorder %s59, %s60
    %p72 = scmp.eq.s32.totalorder %s15, 1
    %p73 = por %p71, %p72
    %p75 = scmp.ne.s32.totalorder %s60, %s74
    %p76 = scmp.eq.s32.totalorder %s15, 0
    %p77 = por %p75, %p76
    %s79 = sadd.s32 %s78, 1
    %p82 = scmp.eq.s32.totalorder %s9, 1
    %p83 = scmp.ne.s32.totalorder %s78, %s80
    %p84 = scmp.eq.s32.totalorder %s9, 0
    %p85 = por %p83, %p84
    %p86 = scmp.ne.s32.totalorder %s78, %s80
    %p87 = scmp.eq.s32.totalorder %s14, 1
    %p88 = por %p86, %p87
    %p89 = scmp.ne.s32.totalorder %s80, %s81
    %p90 = scmp.eq.s32.totalorder %s14, 0
    %p91 = por %p89, %p90
    %p92 = scmp.ne.s32.totalorder %s80, %s81
    %p93 = scmp.eq.s32.totalorder %s15, 1
    %p94 = por %p92, %p93
    %p96 = scmp.ne.s32.totalorder %s81, %s95
    %p97 = scmp.eq.s32.totalorder %s15, 0
    %p98 = por %p96, %p97
    %s99 = ssub.s32 %s16, %s28
    %s100 = ssub.s32 %s17, %s24
    %s101 = sor.u32 %s99, %s100
    %p102 = scmp.eq.s32.totalorder %s101, 0
    %s104 = sadd.s32 %s103, 1
    %s105 = scalar_select %p102, %s103, %s104
    %p108 = pneg %p102
    %p109 = scmp.eq.s32.totalorder %s9, 1
    %p110 = por %p108, %p109
    %p111 = scmp.ne.s32.totalorder %s103, %s106
    %p112 = scmp.eq.s32.totalorder %s9, 0
    %p113 = por %p111, %p112
    %p114 = scmp.ne.s32.totalorder %s103, %s106
    %p115 = scmp.eq.s32.totalorder %s14, 1
    %p116 = por %p114, %p115
    %p117 = scmp.ne.s32.totalorder %s106, %s107
    %p118 = scmp.eq.s32.totalorder %s14, 0
    %p119 = por %p117, %p118
    %p120 = scmp.ne.s32.totalorder %s106, %s107
    %p121 = scmp.eq.s32.totalorder %s15, 1
    %p122 = por %p120, %p121
    %p124 = scmp.ne.s32.totalorder %s107, %s123
    %p125 = scmp.eq.s32.totalorder %s15, 0
    %p126 = por %p124, %p125
    %p127 = scmp.le.s32.totalorder 1, %s9
    %p128 = scmp.lt.s32.totalorder %s9, 3
    %p129 = pnand %p127, %p128
    %p130 = pneg %p129
    // Predicated region
    $region9: #{down_sample_pallas.3} parent=5 // pred_check
      _
    $region10: #{down_sample_pallas.3} parent=5 // pred_check_branch
      %132 = sbr.rel (%p129) target = $region12
    $region11: #{down_sample_pallas.3} parent=5 // pred_region
      %s133 = ssub.s32 %s9, 1
      // Predicated region
      $region13: #{down_sample_pallas.3} parent=11 // pred_check
        %p134 = pneg %p70
      $region14: #{down_sample_pallas.3} parent=11 // pred_check_branch
        %136 = sbr.rel (%p134) target = $region16
      $region15: #{down_sample_pallas.3} parent=11 // pred_region
        _
      $region16: #{down_sample_pallas.3} parent=11 // pred_fallthru
        _
      // Predicated region
      $region17: #{down_sample_pallas.3} parent=11 // pred_check
        %p137 = pneg %p91
      $region18: #{down_sample_pallas.3} parent=11 // pred_check_branch
        %139 = sbr.rel (%p137) target = $region20
      $region19: #{down_sample_pallas.3} parent=11 // pred_region
        _
      $region20: #{down_sample_pallas.3} parent=11 // pred_fallthru
        _
    $region12: #{down_sample_pallas.3} parent=5 // pred_fallthru
      _
    %p140 = scmp.lt.s32.totalorder %s9, 2
    // Predicated region
    $region21: #{down_sample_pallas.3} parent=5 // pred_check
      %p141 = pneg %p140
    $region22: #{down_sample_pallas.3} parent=5 // pred_check_branch
      %143 = sbr.rel (%p141) target = $region24
    $region23: #{down_sample_pallas.3} parent=5 // pred_region
      // Predicated region
      $region25: #{down_sample_pallas.3} parent=23 // pred_check
        %p144 = pneg %p43
      $region26: #{down_sample_pallas.3} parent=23 // pred_check_branch
        %146 = sbr.rel (%p144) target = $region28
      $region27: #{down_sample_pallas.3} parent=23 // pred_region
        %p147 = scmp.lt.s32.totalorder %s16, 1
        %s148 = scalar_select %p147, %s16, 1
        %p149 = scmp.lt.s32.totalorder %s17, 0
        %s150 = scalar_select %p149, %s17, 0
        %s151 = sadd.s32 %s150, %s148
        %s152 = smul.addr %s151, 4
        %s153 = scalar_lea.vmem %s0, %s152
      $region28: #{down_sample_pallas.3} parent=23 // pred_fallthru
        _
    $region24: #{down_sample_pallas.3} parent=5 // pred_fallthru
      _
    %p154 = scmp.le.s32.totalorder 1, %s9
    %p155 = scmp.lt.s32.totalorder %s9, 3
    %p156 = pnand %p154, %p155
    %p157 = pneg %p156
    // Predicated region
    $region29: #{down_sample_pallas.3} parent=5 // pred_check
      _
    $region30: #{down_sample_pallas.3} parent=5 // pred_check_branch
      %159 = sbr.rel (%p156) target = $region32
    $region31: #{down_sample_pallas.3} parent=5 // pred_region
      %s160 = ssub.s32 %s9, 1
      %p161 = scmp.lt.s32.totalorder %s18, 1
      %s162 = scalar_select %p161, %s18, 1
      %p163 = scmp.lt.s32.totalorder %s19, 0
      %s164 = scalar_select %p163, %s19, 0
      %s165 = sadd.s32 %s164, %s162
      %s166 = smul.addr %s165, 4
      %s167 = scalar_lea.vmem %s0, %s166
      %p168 = pneg %p49
      %p169 = pneg %p46
      %p170 = pneg %p70
      %p171 = pneg %p67
      %p172 = pneg %p91
      %p173 = pneg %p88
      %p174 = pneg %p119
      %p175 = pneg %p116
      %p176 = scmp.lt.s32.totalorder %s18, 1
      %s177 = scalar_select %p176, %s18, 1
      %p178 = scmp.lt.s32.totalorder %s19, 0
      %s179 = scalar_select %p178, %s19, 0
      %s180 = sadd.s32 %s179, %s177
      %s181 = smul.addr %s180, 8
      %s182 = scalar_lea.vmem %s3, %s181
      %p183 = scmp.lt.s32.totalorder %s18, 1
      %s184 = scalar_select %p183, %s18, 1
      %p185 = scmp.lt.s32.totalorder %s19, 0
      %s186 = scalar_select %p185, %s19, 0
      %s187 = sadd.s32 %s186, %s184
      %s188 = smul.addr %s187, 4
      %s189 = scalar_lea.vmem %s0, %s188
      %p190 = scmp.lt.s32.totalorder %s18, 1
      %s191 = scalar_select %p190, %s18, 1
      %p192 = scmp.lt.s32.totalorder %s19, 0
      %s193 = scalar_select %p192, %s19, 0
      %s194 = sadd.s32 %s193, %s191
      %s195 = smul.addr %s194, 8
      %s196 = scalar_lea.vmem %s3, %s195
      %v197 = vld [vmem:[%s1] sm:$0xff]
      %v198 = vld [vmem:[%s189] sm:$0xf]
      %v199 = vld [vmem:[%s2] sm:$0xff]
      %201 = vset.pattern.permute.xlu0 0
      %202 = vperm.xlu0 %201, %v199
      %v203 = vpop.permute.xlu0 %202
      %vm205 = vcmask 31744
      %v207 = vsel %vm205, %v197, 0
      %vm209 = vcmask 1043456
      %v211 = vsel %vm209, %v198, 0
      %213 = vmatprep.subr.mxu0 0.0
      %214 = vmatpush1.msra.mxu0 %v211
      %215 = vmatprep.subr.mxu0 0.0
      %216 = vmatpush1.msra.mxu0 0.0
      %217 = vmatprep.subr.mxu0 0.0
      %218 = vmatpush1.msra.mxu0 0.0
      %219 = vmatprep.subr.mxu0 0.0
      %220 = vmatpush1.msra.mxu0 0.0
      %221 = vmatprep.subr.mxu0 0.0
      %222 = vmatpush1.msra.mxu0 0.0
      %223 = vmatprep.subr.mxu0 0.0
      %224 = vmatpush1.msra.mxu0 0.0
      %225 = vmatprep.subr.mxu0 0.0
      %226 = vmatpush1.msra.mxu0 0.0
      %227 = vmatprep.subr.mxu0 0.0
      %228 = vmatpush1.msra.mxu0 0.0
      %229 = vmatprep.subr.mxu0 0.0
      %230 = vmatpush1.msra.mxu0 0.0
      %231 = vmatprep.subr.mxu0 0.0
      %232 = vmatpush1.msra.mxu0 0.0
      %233 = vmatprep.subr.mxu0 0.0
      %234 = vmatpush1.msra.mxu0 0.0
      %235 = vmatprep.subr.mxu0 0.0
      %236 = vmatpush1.msra.mxu0 0.0
      %237 = vmatprep.subr.mxu0 0.0
      %238 = vmatpush1.msra.mxu0 0.0
      %239 = vmatprep.subr.mxu0 0.0
      %240 = vmatpush1.msra.mxu0 0.0
      %241 = vmatprep.subr.mxu0 0.0
      %242 = vmatpush1.msra.mxu0 0.0
      %243 = vmatprep.subr.mxu0 0.0
      %244 = vmatpush1.msra.mxu0 0.0
      %245 = vmatprep.subr.mxu0 0.0
      %246 = vmatpush1.msra.mxu0 0.0
      %247 = vmatprep.subr.mxu0 0.0
      %248 = vmatpush1.msra.mxu0 0.0
      %249 = vmatprep.subr.mxu0 0.0
      %250 = vmatpush1.msra.mxu0 0.0
      %251 = vmatprep.subr.mxu0 0.0
      %252 = vmatpush1.msra.mxu0 0.0
      %253 = vmatprep.subr.mxu0 0.0
      %254 = vmatpush1.msra.mxu0 0.0
      %255 = vmatprep.subr.mxu0 0.0
      %256 = vmatpush1.msra.mxu0 0.0
      %257 = vmatprep.subr.mxu0 0.0
      %258 = vmatpush1.msra.mxu0 0.0
      %259 = vmatprep.subr.mxu0 0.0
      %260 = vmatpush1.msra.mxu0 0.0
      %261 = vmatprep.subr.mxu0 0.0
      %262 = vmatpush1.msra.mxu0 0.0
      %263 = vmatprep.subr.mxu0 0.0
      %264 = vmatpush1.msra.mxu0 0.0
      %265 = vmatprep.subr.mxu0 0.0
      %266 = vmatpush1.msra.mxu0 0.0
      %267 = vmatprep.subr.mxu0 0.0
      %268 = vmatpush1.msra.mxu0 0.0
      %269 = vmatprep.subr.mxu0 0.0
      %270 = vmatpush1.msra.mxu0 0.0
      %271 = vmatprep.subr.mxu0 0.0
      %272 = vmatpush1.msra.mxu0 0.0
      %273 = vmatprep.subr.mxu0 0.0
      %274 = vmatpush1.msra.mxu0 0.0
      %275 = vmatprep.subr.mxu0 0.0
      %276 = vmatpush1.msra.mxu0 0.0
      %277 = vmatprep.mubr.f32.mxu0 0.0
      %278 = vmatmul.mubr.f32.gmra.mrb[0].mxu0 %v207
      %v279 = vpop.f32.mrb[0].mxu0
      %v280 = vadd.f32 %v203, %v279
      %v281 = vpop.f32.mrb[0].mxu0
      %282 = vdwg.mxu0
      %vm283 = vcmask 523264
      %284 = vst.msk [vmem:[%s196] sm:$0xff] %vm283, %v280
      %p285 = scmp.lt.s32.totalorder %s18, 1
      %s286 = scalar_select %p285, %s18, 1
      %p287 = scmp.lt.s32.totalorder %s19, 0
      %s288 = scalar_select %p287, %s19, 0
      %s289 = sadd.s32 %s288, %s286
      %s290 = smul.addr %s289, 8
      %s291 = scalar_lea.vmem %s3, %s290
      // Predicated region
      $region33: #{down_sample_pallas.3} parent=31 // pred_check
        %p292 = pneg %p116
      $region34: #{down_sample_pallas.3} parent=31 // pred_check_branch
        %294 = sbr.rel (%p292) target = $region36
      $region35: #{down_sample_pallas.3} parent=31 // pred_region
        _
      $region36: #{down_sample_pallas.3} parent=31 // pred_fallthru
        _
    $region32: #{down_sample_pallas.3} parent=5 // pred_fallthru
      _
    %p295 = scmp.le.s32.totalorder 2, %s9
    // Predicated region
    $region37: #{down_sample_pallas.3} parent=5 // pred_check
      %p296 = pneg %p295
    $region38: #{down_sample_pallas.3} parent=5 // pred_check_branch
      %298 = sbr.rel (%p296) target = $region40
    $region39: #{down_sample_pallas.3} parent=5 // pred_region
      %s299 = ssub.s32 %s9, 2
      // Predicated region
      $region41: #{down_sample_pallas.3} parent=39 // pred_check
        %p300 = pneg %p122
      $region42: #{down_sample_pallas.3} parent=39 // pred_check_branch
        %302 = sbr.rel (%p300) target = $region44
      $region43: #{down_sample_pallas.3} parent=39 // pred_region
        %p303 = scmp.lt.s32.totalorder %s20, 1
        %s304 = scalar_select %p303, %s20, 1
        %p305 = scmp.lt.s32.totalorder %s21, 0
        %s306 = scalar_select %p305, %s21, 0
        %s307 = sadd.s32 %s306, %s304
        %s308 = smul.addr %s307, 8
        %s309 = scalar_lea.vmem %s3, %s308
      $region44: #{down_sample_pallas.3} parent=39 // pred_fallthru
        _
    $region40: #{down_sample_pallas.3} parent=5 // pred_fallthru
      _
  $region6: #{down_sample_pallas.3} parent=0 // loop_footer
    %s13 = sadd.s32 1, %s9
  $region7: #{down_sample_pallas.3} parent=0 // loop_footer_branch
    %8 = sbr.rel target = $region3
  $region8: #{down_sample_pallas.3} parent=0 // loop_exit
    _

// kernel: down_sample_pallas.2
$region0: #{down_sample_pallas.2}
  #allocation0 [shape = 'u32[]', space=smem, size = 0x4, offset = 0x4, fixed_abs, tag = 'smem constant byte address 0x4 - core index']
  #allocation1 [shape = 'u32[144,128]{1,0:T(1,128)}', space=vmem, size = 0x12000, scoped, tag = 'internal scratch']
  %s0 = inlined_call_operand.hbm [shape: f32[2,4,16,16], index: 0, kind: input, shape index: {}]
  %s1 = inlined_call_operand.vmem [shape: f32[16,9], index: 1, kind: input, shape index: {}]
  %s2 = inlined_call_operand.vmem [shape: f32[2,4,8,8], index: 2, kind: output, shape index: {0}]
  %s3 = inlined_call_operand.vmem [shape: f32[2,4,1], index: 3, kind: output, shape index: {1}]
  %s4 = inlined_call_operand.vmem [shape: f32[2,4,4], index: 4, kind: output, shape index: {2}]
  %5 = xla_tuple %s2, %s3, %s4
  %s6 = sld [smem:[#allocation0]]
  $region61: #{down_sample_pallas.2} parent=0
    _
  %s8 = ssub.s32 1, %s6
  %s9 = scalar_select 0, %s8, %s6
  $region1: #{down_sample_pallas.2} parent=0
    #allocation2 [shape = 'u8[65536]{0}', space=vmem, size = 0x10000, scoped, tag = 'input window, operand 0']
    #allocation3 [shape = 's32[2]{0}', space=sflag, size = 0x8, scoped, tag = 'scoped memory for down_sample_pallas.2']
    %10 = vsyncpa [#allocation3], 0
    %s11 = scalar_lea.sflag [#allocation3], 1
    %12 = vsyncpa %s11, 0
    loop: start=0, step=1, limit=4
    $region2: #{down_sample_pallas.2} parent=1 // loop_pre_header
      _
    $region3: #{down_sample_pallas.2} parent=1 // loop_header
      %s14 = sphi 0, %s18
      %p15 = scmp.ge.s32.totalorder %s14, 4
      %s24 = sphi 0, %s26
      %s27 = sphi 0, %s24
      %s28 = sphi 0, %s27
      %s44 = sphi 0, %s28
      %s48 = sphi 0, %s48
      %s50 = sphi 0, %s48
      %s51 = sphi 0, %s50
      %s65 = sphi 0, %s51
      %s71 = sphi 0, %s73
      %s74 = sphi 0, %s71
      %s75 = sphi 0, %s74
      %s91 = sphi 0, %s75
      %s97 = sphi 0, %s99
      %s100 = sphi 0, %s97
      %s101 = sphi 0, %s100
      %s117 = sphi 0, %s101
      %s123 = sphi 0, %s125
      %s126 = sphi 0, %s123
      %s127 = sphi 0, %s126
      %s143 = sphi 0, %s127
    $region4: #{down_sample_pallas.2} parent=1 // loop_header_branch
      %17 = sbr.rel (%p15) target = $region8
    $region5: #{down_sample_pallas.2} parent=1 // loop_body
      %s19 = ssub.s32 %s14, 1
      %s20 = ssub.s32 %s14, 2
      %s21 = sadd.s32 %s14, 1
      %s22 = ssub.s32 %s14, %s21
      %p23 = scmp.eq.s32.totalorder %s22, 0
      %s25 = sadd.s32 %s24, 1
      %s26 = scalar_select %p23, %s24, %s25
      %p29 = pneg %p23
      %p30 = scmp.eq.s32.totalorder %s14, 1
      %p31 = por %p29, %p30
      %p32 = scmp.ne.s32.totalorder %s24, %s27
      %p33 = scmp.eq.s32.totalorder %s14, 0
      %p34 = por %p32, %p33
      %p35 = scmp.ne.s32.totalorder %s24, %s27
      %p36 = scmp.eq.s32.totalorder %s19, 1
      %p37 = por %p35, %p36
      %p38 = scmp.ne.s32.totalorder %s27, %s28
      %p39 = scmp.eq.s32.totalorder %s19, 0
      %p40 = por %p38, %p39
      %p41 = scmp.ne.s32.totalorder %s27, %s28
      %p42 = scmp.eq.s32.totalorder %s20, 1
      %p43 = por %p41, %p42
      %p45 = scmp.ne.s32.totalorder %s28, %s44
      %p46 = scmp.eq.s32.totalorder %s20, 0
      %p47 = por %p45, %p46
      %s49 = sadd.s32 %s48, 1
      %p52 = scmp.eq.s32.totalorder %s14, 1
      %p53 = scmp.ne.s32.totalorder %s48, %s50
      %p54 = scmp.eq.s32.totalorder %s14, 0
      %p55 = por %p53, %p54
      %p56 = scmp.ne.s32.totalorder %s48, %s50
      %p57 = scmp.eq.s32.totalorder %s19, 1
      %p58 = por %p56, %p57
      %p59 = scmp.ne.s32.totalorder %s50, %s51
      %p60 = scmp.eq.s32.totalorder %s19, 0
      %p61 = por %p59, %p60
      %p62 = scmp.ne.s32.totalorder %s50, %s51
      %p63 = scmp.eq.s32.totalorder %s20, 1
      %p64 = por %p62, %p63
      %p66 = scmp.ne.s32.totalorder %s51, %s65
      %p67 = scmp.eq.s32.totalorder %s20, 0
      %p68 = por %p66, %p67
      %s69 = ssub.s32 %s14, %s21
      %p70 = scmp.eq.s32.totalorder %s69, 0
      %s72 = sadd.s32 %s71, 1
      %s73 = scalar_select %p70, %s71, %s72
      %p76 = pneg %p70
      %p77 = scmp.eq.s32.totalorder %s14, 1
      %p78 = por %p76, %p77
      %p79 = scmp.ne.s32.totalorder %s71, %s74
      %p80 = scmp.eq.s32.totalorder %s14, 0
      %p81 = por %p79, %p80
      %p82 = scmp.ne.s32.totalorder %s71, %s74
      %p83 = scmp.eq.s32.totalorder %s19, 1
      %p84 = por %p82, %p83
      %p85 = scmp.ne.s32.totalorder %s74, %s75
      %p86 = scmp.eq.s32.totalorder %s19, 0
      %p87 = por %p85, %p86
      %p88 = scmp.ne.s32.totalorder %s74, %s75
      %p89 = scmp.eq.s32.totalorder %s20, 1
      %p90 = por %p88, %p89
      %p92 = scmp.ne.s32.totalorder %s75, %s91
      %p93 = scmp.eq.s32.totalorder %s20, 0
      %p94 = por %p92, %p93
      %s95 = ssub.s32 %s14, %s21
      %p96 = scmp.eq.s32.totalorder %s95, 0
      %s98 = sadd.s32 %s97, 1
      %s99 = scalar_select %p96, %s97, %s98
      %p102 = pneg %p96
      %p103 = scmp.eq.s32.totalorder %s14, 1
      %p104 = por %p102, %p103
      %p105 = scmp.ne.s32.totalorder %s97, %s100
      %p106 = scmp.eq.s32.totalorder %s14, 0
      %p107 = por %p105, %p106
      %p108 = scmp.ne.s32.totalorder %s97, %s100
      %p109 = scmp.eq.s32.totalorder %s19, 1
      %p110 = por %p108, %p109
      %p111 = scmp.ne.s32.totalorder %s100, %s101
      %p112 = scmp.eq.s32.totalorder %s19, 0
      %p113 = por %p111, %p112
      %p114 = scmp.ne.s32.totalorder %s100, %s101
      %p115 = scmp.eq.s32.totalorder %s20, 1
      %p116 = por %p114, %p115
      %p118 = scmp.ne.s32.totalorder %s101, %s117
      %p119 = scmp.eq.s32.totalorder %s20, 0
      %p120 = por %p118, %p119
      %s121 = ssub.s32 %s14, %s21
      %p122 = scmp.eq.s32.totalorder %s121, 0
      %s124 = sadd.s32 %s123, 1
      %s125 = scalar_select %p122, %s123, %s124
      %p128 = pneg %p122
      %p129 = scmp.eq.s32.totalorder %s14, 1
      %p130 = por %p128, %p129
      %p131 = scmp.ne.s32.totalorder %s123, %s126
      %p132 = scmp.eq.s32.totalorder %s14, 0
      %p133 = por %p131, %p132
      %p134 = scmp.ne.s32.totalorder %s123, %s126
      %p135 = scmp.eq.s32.totalorder %s19, 1
      %p136 = por %p134, %p135
      %p137 = scmp.ne.s32.totalorder %s126, %s127
      %p138 = scmp.eq.s32.totalorder %s19, 0
      %p139 = por %p137, %p138
      %p140 = scmp.ne.s32.totalorder %s126, %s127
      %p141 = scmp.eq.s32.totalorder %s20, 1
      %p142 = por %p140, %p141
      %p144 = scmp.ne.s32.totalorder %s127, %s143
      %p145 = scmp.eq.s32.totalorder %s20, 0
      %p146 = por %p144, %p145
      %p147 = scmp.le.s32.totalorder 1, %s14
      %p148 = scmp.lt.s32.totalorder %s14, 3
      %p149 = pnand %p147, %p148
      %p150 = pneg %p149
      // Predicated region
      $region9: #{down_sample_pallas.2} parent=5 // pred_check
        _
      $region10: #{down_sample_pallas.2} parent=5 // pred_check_branch
        %152 = sbr.rel (%p149) target = $region12
      $region11: #{down_sample_pallas.2} parent=5 // pred_region
        %s153 = ssub.s32 %s14, 1
        // Predicated region
        $region13: #{down_sample_pallas.2} parent=11 // pred_check
          %p154 = pneg %p61
        $region14: #{down_sample_pallas.2} parent=11 // pred_check_branch
          %156 = sbr.rel (%p154) target = $region16
        $region15: #{down_sample_pallas.2} parent=11 // pred_region
          _
        $region16: #{down_sample_pallas.2} parent=11 // pred_fallthru
          _
      $region12: #{down_sample_pallas.2} parent=5 // pred_fallthru
        _
      %p157 = scmp.lt.s32.totalorder %s14, 2
      // Predicated region
      $region17: #{down_sample_pallas.2} parent=5 // pred_check
        %p158 = pneg %p157
      $region18: #{down_sample_pallas.2} parent=5 // pred_check_branch
        %160 = sbr.rel (%p158) target = $region20
      $region19: #{down_sample_pallas.2} parent=5 // pred_region
        // Predicated region
        $region21: #{down_sample_pallas.2} parent=19 // pred_check
          %p161 = pneg %p34
        $region22: #{down_sample_pallas.2} parent=19 // pred_check_branch
          %163 = sbr.rel (%p161) target = $region24
        $region23: #{down_sample_pallas.2} parent=19 // pred_region
          %s164 = sand.u32 %s24, 1
          %s165 = scalar_lea.sflag [#allocation3], %s164
          %s166 = sand.u32 %s24, 1
          %s167 = smul.addr %s166, 64
          %s168 = scalar_lea.vmem [#allocation2], %s167
          %s170 = ssub.s32 1024, 1024
          %171 = vsyncadd %s165, %s170
          %s172 = smul.addr %s14, 8
          %s173 = smul.addr %s172, 128
          %s174 = scalar_lea.hbm %s0, %s173
          %s175 = sshll.u32 %s168, 4
          %s176 = int_to_ptr.vmem [resolvable:$true] %s175
          %181 = dma.hbm_to_vmem [thread:$0]  %s174, 1024, %s176, %s165, 128, 128, 8
        $region24: #{down_sample_pallas.2} parent=19 // pred_fallthru
          _
      $region20: #{down_sample_pallas.2} parent=5 // pred_fallthru
        _
      %p182 = scmp.le.s32.totalorder 1, %s14
      %p183 = scmp.lt.s32.totalorder %s14, 3
      %p184 = pnand %p182, %p183
      %p185 = pneg %p184
      // Predicated region
      $region25: #{down_sample_pallas.2} parent=5 // pred_check
        _
      $region26: #{down_sample_pallas.2} parent=5 // pred_check_branch
        %187 = sbr.rel (%p184) target = $region28
      $region27: #{down_sample_pallas.2} parent=5 // pred_region
        %s188 = ssub.s32 %s14, 1
        %s189 = sand.u32 %s27, 1
        %s190 = scalar_lea.sflag [#allocation3], %s189
        %s191 = sand.u32 %s27, 1
        %s192 = smul.addr %s191, 64
        %s193 = scalar_lea.vmem [#allocation2], %s192
        // Predicated region
        $region29: #{down_sample_pallas.2} parent=27 // pred_check
          %p194 = pneg %p40
        $region30: #{down_sample_pallas.2} parent=27 // pred_check_branch
          %196 = sbr.rel (%p194) target = $region32
        $region31: #{down_sample_pallas.2} parent=27 // pred_region
          %197 = dma.done %s190, 1024
        $region32: #{down_sample_pallas.2} parent=27 // pred_fallthru
          _
        %s198 = sand.u32 %s27, 1
        %s199 = scalar_lea.sflag [#allocation3], %s198
        %s200 = sand.u32 %s27, 1
        %s201 = smul.addr %s200, 64
        %s202 = scalar_lea.vmem [#allocation2], %s201
        %p203 = pneg %p40
        %p204 = pneg %p37
        %p205 = pneg %p61
        %p206 = pneg %p58
        %p207 = pneg %p87
        %p208 = pneg %p84
        %p209 = scmp.lt.s32.totalorder %s19, 1
        %s210 = scalar_select %p209, %s19, 1
        %s211 = smul.addr %s210, 4
        %s212 = smul.addr %s211, 8
        %s213 = scalar_lea.vmem %s2, %s212
        %p214 = pneg %p113
        %p215 = pneg %p110
        %p216 = scmp.lt.s32.totalorder %s19, 1
        %s217 = scalar_select %p216, %s19, 1
        %s218 = smul.addr %s217, 4
        %s219 = scalar_lea.vmem %s3, %s218
        %p220 = pneg %p139
        %p221 = pneg %p136
        %p222 = scmp.lt.s32.totalorder %s19, 1
        %s223 = scalar_select %p222, %s19, 1
        %s224 = smul.addr %s223, 4
        %s225 = scalar_lea.vmem %s4, %s224
        %p226 = scmp.lt.s32.totalorder %s19, 1
        %s227 = scalar_select %p226, %s19, 1
        %s228 = smul.addr %s227, 4
        %s229 = smul.addr %s228, 8
        %s230 = scalar_lea.vmem %s2, %s229
        %p231 = scmp.lt.s32.totalorder %s19, 1
        %s232 = scalar_select %p231, %s19, 1
        %s233 = smul.addr %s232, 4
        %s234 = scalar_lea.vmem %s3, %s233
        %p235 = scmp.lt.s32.totalorder %s19, 1
        %s236 = scalar_select %p235, %s19, 1
        %s237 = smul.addr %s236, 4
        %s238 = scalar_lea.vmem %s4, %s237
        %vm239 = vcmask 3072
        %240 = vst.msk [vmem:[%s234] sm:$0xf] %vm239, 0.0
        %vm241 = vcmask 27648
        %242 = vst.msk [vmem:[%s238] sm:$0xf] %vm241, 0.0
        %v243 = vld [vmem:[%s1] sm:$0xff]
        %v244 = vld [vmem:[%s1 + $0x8] sm:$0xff]
        %v245 = vld [vmem:[%s193] sm:$0x1]
        %v246 = vld [vmem:[%s193 + $0x10] sm:$0x1]
        %v247 = vld [vmem:[%s193 + $0x20] sm:$0x1]
        %v248 = vld [vmem:[%s193 + $0x30] sm:$0x1]
        %v253 = vrot.slane %v246, 7
        %vm254 = vcmask 1041409
        %v255 = vsel %vm254, %v253, %v245
        %v256 = vrot.slane %v247, 6
        %vm257 = vcmask 1042434
        %v258 = vsel %vm257, %v256, %v255
        %v259 = vrot.slane %v248, 5
        %vm260 = vcmask 1043459
        %v261 = vsel %vm260, %v259, %v258
        %vm262 = vcmask 130048
        %v263 = vsel %vm262, %v261, 0
        %265 = vmatprep.subr.mxu0 0.0
        %266 = vmatpush1.msra.mxu0 %v243
        %267 = vmatprep.subr.mxu0 0.0
        %268 = vmatpush1.msra.mxu0 %v244
        %269 = vmatprep.subr.mxu0 0.0
        %270 = vmatpush1.msra.mxu0 0.0
        %271 = vmatprep.subr.mxu0 0.0
        %272 = vmatpush1.msra.mxu0 0.0
        %273 = vmatprep.subr.mxu0 0.0
        %274 = vmatpush1.msra.mxu0 0.0
        %275 = vmatprep.subr.mxu0 0.0
        %276 = vmatpush1.msra.mxu0 0.0
        %277 = vmatprep.subr.mxu0 0.0
        %278 = vmatpush1.msra.mxu0 0.0
        %279 = vmatprep.subr.mxu0 0.0
        %280 = vmatpush1.msra.mxu0 0.0
        %281 = vmatprep.subr.mxu0 0.0
        %282 = vmatpush1.msra.mxu0 0.0
        %283 = vmatprep.subr.mxu0 0.0
        %284 = vmatpush1.msra.mxu0 0.0
        %285 = vmatprep.subr.mxu0 0.0
        %286 = vmatpush1.msra.mxu0 0.0
        %287 = vmatprep.subr.mxu0 0.0
        %288 = vmatpush1.msra.mxu0 0.0
        %289 = vmatprep.subr.mxu0 0.0
        %290 = vmatpush1.msra.mxu0 0.0
        %291 = vmatprep.subr.mxu0 0.0
        %292 = vmatpush1.msra.mxu0 0.0
        %293 = vmatprep.subr.mxu0 0.0
        %294 = vmatpush1.msra.mxu0 0.0
        %295 = vmatprep.subr.mxu0 0.0
        %296 = vmatpush1.msra.mxu0 0.0
        %297 = vmatprep.subr.mxu0 0.0
        %298 = vmatpush1.msra.mxu0 0.0
        %299 = vmatprep.subr.mxu0 0.0
        %300 = vmatpush1.msra.mxu0 0.0
        %301 = vmatprep.subr.mxu0 0.0
        %302 = vmatpush1.msra.mxu0 0.0
        %303 = vmatprep.subr.mxu0 0.0
        %304 = vmatpush1.msra.mxu0 0.0
        %305 = vmatprep.subr.mxu0 0.0
        %306 = vmatpush1.msra.mxu0 0.0
        %307 = vmatprep.subr.mxu0 0.0
        %308 = vmatpush1.msra.mxu0 0.0
        %309 = vmatprep.subr.mxu0 0.0
        %310 = vmatpush1.msra.mxu0 0.0
        %311 = vmatprep.subr.mxu0 0.0
        %312 = vmatpush1.msra.mxu0 0.0
        %313 = vmatprep.subr.mxu0 0.0
        %314 = vmatpush1.msra.mxu0 0.0
        %315 = vmatprep.subr.mxu0 0.0
        %316 = vmatpush1.msra.mxu0 0.0
        %317 = vmatprep.subr.mxu0 0.0
        %318 = vmatpush1.msra.mxu0 0.0
        %319 = vmatprep.subr.mxu0 0.0
        %320 = vmatpush1.msra.mxu0 0.0
        %321 = vmatprep.subr.mxu0 0.0
        %322 = vmatpush1.msra.mxu0 0.0
        %323 = vmatprep.subr.mxu0 0.0
        %324 = vmatpush1.msra.mxu0 0.0
        %325 = vmatprep.subr.mxu0 0.0
        %326 = vmatpush1.msra.mxu0 0.0
        %327 = vmatprep.subr.mxu0 0.0
        %328 = vmatpush1.msra.mxu0 0.0
        %329 = vmatprep.mubr.f32.mxu0 0.0
        %330 = vmatmul.mubr.f32.gmra.mrb[0].mxu0 %v263
        %v331 = vpop.f32.mrb[0].mxu0
        %v332 = vadd.f32 0.0, %v331
        %v333 = vpop.f32.mrb[0].mxu0
        %334 = vdwg.mxu0
        %v337 = vunpack.c.l.s4 1966171168
        %v338 = vunpack.c.0.s8 %v337
        %v339 = vlaneseq
        %v340 = vshrl.u32 %v339, 7
        %v341 = vsub.s32 %v338, %v340
        %v342 = vrot.slane %v332, %v341
        %v343 = vcombine.high %v342, %v342
        %v345 = vunpack.c.l.s4 1966171168
        %v346 = vunpack.c.0.s8 %v345
        %v347 = vlaneseq
        %v348 = vshrl.u32 %v347, 7
        %v349 = vsub.s32 %v346, %v348
        %v350 = vrot.slane %v342, %v349
        %v352 = vunpack.c.l.s4 1966171168
        %v353 = vunpack.c.0.s8 %v352
        %v354 = vlaneseq
        %v355 = vshrl.u32 %v354, 7
        %v356 = vsub.s32 %v353, %v355
        %v357 = vrot.slane %v343, %v356
        %v358 = vcombine.high %v350, %v350
        %v359 = vcombine.high %v357, %v357
        %vm364 = vcmask 57344
        %365 = vst.msk [vmem:[%s230] sm:$0x1] %vm364, %v350
        %366 = vst.msk [vmem:[%s230 + $0x8] sm:$0x1] %vm364, %v357
        %367 = vst.msk [vmem:[%s230 + $0x10] sm:$0x1] %vm364, %v358
        %368 = vst.msk [vmem:[%s230 + $0x18] sm:$0x1] %vm364, %v359
        %v369 = vld [vmem:[%s234] sm:$0xf]
        %370 = vrot.lane.b32.xlu0 %v332, 120
        %v371 = vpop.permute.xlu0 %370
        %v373 = vadd.f32 %v369, %v371
        %374 = vst.msk [vmem:[%s234] sm:$0xf] %vm239, %v373
        %v375 = vld [vmem:[%s238] sm:$0xf]
        %vm376 = vcmask 64512
        %v377 = vsel %vm376, %v332, 0
        %379 = vmatprep.subr.mxu0 0.0
        %380 = vmatpush1.xpose.msra.mxu0 %v377
        %381 = vmatprep.subr.mxu0 0.0
        %382 = vmatpush1.xpose.msra.mxu0 0.0
        %383 = vmatprep.subr.mxu0 0.0
        %384 = vmatpush1.xpose.msra.mxu0 0.0
        %385 = vmatprep.subr.mxu0 0.0
        %386 = vmatpush1.xpose.msra.mxu0 0.0
        %387 = vmatprep.subr.mxu0 0.0
        %388 = vmatpush1.xpose.msra.mxu0 0.0
        %389 = vmatprep.subr.mxu0 0.0
        %390 = vmatpush1.xpose.msra.mxu0 0.0
        %391 = vmatprep.subr.mxu0 0.0
        %392 = vmatpush1.xpose.msra.mxu0 0.0
        %393 = vmatprep.subr.mxu0 0.0
        %394 = vmatpush1.xpose.msra.mxu0 0.0
        %395 = vmatprep.subr.mxu0 0.0
        %396 = vmatpush1.xpose.msra.mxu0 0.0
        %397 = vmatprep.subr.mxu0 0.0
        %398 = vmatpush1.xpose.msra.mxu0 0.0
        %399 = vmatprep.subr.mxu0 0.0
        %400 = vmatpush1.xpose.msra.mxu0 0.0
        %401 = vmatprep.subr.mxu0 0.0
        %402 = vmatpush1.xpose.msra.mxu0 0.0
        %403 = vmatprep.subr.mxu0 0.0
        %404 = vmatpush1.xpose.msra.mxu0 0.0
        %405 = vmatprep.subr.mxu0 0.0
        %406 = vmatpush1.xpose.msra.mxu0 0.0
        %407 = vmatprep.subr.mxu0 0.0
        %408 = vmatpush1.xpose.msra.mxu0 0.0
        %409 = vmatprep.subr.mxu0 0.0
        %410 = vmatpush1.xpose.msra.mxu0 0.0
        %411 = vmatprep.subr.mxu0 0.0
        %412 = vmatpush1.xpose.msra.mxu0 0.0
        %413 = vmatprep.subr.mxu0 0.0
        %414 = vmatpush1.xpose.msra.mxu0 0.0
        %415 = vmatprep.subr.mxu0 0.0
        %416 = vmatpush1.xpose.msra.mxu0 0.0
        %417 = vmatprep.subr.mxu0 0.0
        %418 = vmatpush1.xpose.msra.mxu0 0.0
        %419 = vmatprep.subr.mxu0 0.0
        %420 = vmatpush1.xpose.msra.mxu0 0.0
        %421 = vmatprep.subr.mxu0 0.0
        %422 = vmatpush1.xpose.msra.mxu0 0.0
        %423 = vmatprep.subr.mxu0 0.0
        %424 = vmatpush1.xpose.msra.mxu0 0.0
        %425 = vmatprep.subr.mxu0 0.0
        %426 = vmatpush1.xpose.msra.mxu0 0.0
        %427 = vmatprep.subr.mxu0 0.0
        %428 = vmatpush1.xpose.msra.mxu0 0.0
        %429 = vmatprep.subr.mxu0 0.0
        %430 = vmatpush1.xpose.msra.mxu0 0.0
        %431 = vmatprep.subr.mxu0 0.0
        %432 = vmatpush1.xpose.msra.mxu0 0.0
        %433 = vmatprep.subr.mxu0 0.0
        %434 = vmatpush1.xpose.msra.mxu0 0.0
        %435 = vmatprep.subr.mxu0 0.0
        %436 = vmatpush1.xpose.msra.mxu0 0.0
        %437 = vmatprep.subr.mxu0 0.0
        %438 = vmatpush1.xpose.msra.mxu0 0.0
        %439 = vmatprep.subr.mxu0 0.0
        %440 = vmatpush1.xpose.msra.mxu0 0.0
        %441 = vmatprep.subr.mxu0 0.0
        %442 = vmatpush1.xpose.msra.mxu0 0.0
        %443 = vmatprep.mubr.f32.mxu0 0.0
        %444 = vmatmul.mubr.f32.gmra.mrb[0].mxu0 %v377
        %v445 = vpop.f32.mrb[0].mxu0
        %v446 = vadd.f32 0.0, %v445
        %v447 = vpop.f32.mrb[0].mxu0
        %448 = vdwg.mxu0
        %v449 = vadd.f32 %v375, %v446
        %450 = vst.msk [vmem:[%s238] sm:$0xf] %vm241, %v449
        %v451 = vld [vmem:[%s193 + $0x2] sm:$0x1]
        %v452 = vld [vmem:[%s193 + $0x12] sm:$0x1]
        %v453 = vld [vmem:[%s193 + $0x22] sm:$0x1]
        %v454 = vld [vmem:[%s193 + $0x32] sm:$0x1]
        %v459 = vrot.slane %v452, 7
        %v460 = vsel %vm254, %v459, %v451
        %v461 = vrot.slane %v453, 6
        %v462 = vsel %vm257, %v461, %v460
        %v463 = vrot.slane %v454, 5
        %v464 = vsel %vm260, %v463, %v462
        %v465 = vsel %vm262, %v464, 0
        %467 = vmatprep.subr.mxu0 0.0
        %468 = vmatpush1.msra.mxu0 %v243
        %469 = vmatprep.subr.mxu0 0.0
        %470 = vmatpush1.msra.mxu0 %v244
        %471 = vmatprep.subr.mxu0 0.0
        %472 = vmatpush1.msra.mxu0 0.0
        %473 = vmatprep.subr.mxu0 0.0
        %474 = vmatpush1.msra.mxu0 0.0
        %475 = vmatprep.subr.mxu0 0.0
        %476 = vmatpush1.msra.mxu0 0.0
        %477 = vmatprep.subr.mxu0 0.0
        %478 = vmatpush1.msra.mxu0 0.0
        %479 = vmatprep.subr.mxu0 0.0
        %480 = vmatpush1.msra.mxu0 0.0
        %481 = vmatprep.subr.mxu0 0.0
        %482 = vmatpush1.msra.mxu0 0.0
        %483 = vmatprep.subr.mxu0 0.0
        %484 = vmatpush1.msra.mxu0 0.0
        %485 = vmatprep.subr.mxu0 0.0
        %486 = vmatpush1.msra.mxu0 0.0
        %487 = vmatprep.subr.mxu0 0.0
        %488 = vmatpush1.msra.mxu0 0.0
        %489 = vmatprep.subr.mxu0 0.0
        %490 = vmatpush1.msra.mxu0 0.0
        %491 = vmatprep.subr.mxu0 0.0
        %492 = vmatpush1.msra.mxu0 0.0
        %493 = vmatprep.subr.mxu0 0.0
        %494 = vmatpush1.msra.mxu0 0.0
        %495 = vmatprep.subr.mxu0 0.0
        %496 = vmatpush1.msra.mxu0 0.0
        %497 = vmatprep.subr.mxu0 0.0
        %498 = vmatpush1.msra.mxu0 0.0
        %499 = vmatprep.subr.mxu0 0.0
        %500 = vmatpush1.msra.mxu0 0.0
        %501 = vmatprep.subr.mxu0 0.0
        %502 = vmatpush1.msra.mxu0 0.0
        %503 = vmatprep.subr.mxu0 0.0
        %504 = vmatpush1.msra.mxu0 0.0
        %505 = vmatprep.subr.mxu0 0.0
        %506 = vmatpush1.msra.mxu0 0.0
        %507 = vmatprep.subr.mxu0 0.0
        %508 = vmatpush1.msra.mxu0 0.0
        %509 = vmatprep.subr.mxu0 0.0
        %510 = vmatpush1.msra.mxu0 0.0
        %511 = vmatprep.subr.mxu0 0.0
        %512 = vmatpush1.msra.mxu0 0.0
        %513 = vmatprep.subr.mxu0 0.0
        %514 = vmatpush1.msra.mxu0 0.0
        %515 = vmatprep.subr.mxu0 0.0
        %516 = vmatpush1.msra.mxu0 0.0
        %517 = vmatprep.subr.mxu0 0.0
        %518 = vmatpush1.msra.mxu0 0.0
        %519 = vmatprep.subr.mxu0 0.0
        %520 = vmatpush1.msra.mxu0 0.0
        %521 = vmatprep.subr.mxu0 0.0
        %522 = vmatpush1.msra.mxu0 0.0
        %523 = vmatprep.subr.mxu0 0.0
        %524 = vmatpush1.msra.mxu0 0.0
        %525 = vmatprep.subr.mxu0 0.0
        %526 = vmatpush1.msra.mxu0 0.0
        %527 = vmatprep.subr.mxu0 0.0
        %528 = vmatpush1.msra.mxu0 0.0
        %529 = vmatprep.subr.mxu0 0.0
        %530 = vmatpush1.msra.mxu0 0.0
        %531 = vmatprep.mubr.f32.mxu0 0.0
        %532 = vmatmul.mubr.f32.gmra.mrb[0].mxu0 %v465
        %v533 = vpop.f32.mrb[0].mxu0
        %v534 = vadd.f32 0.0, %v533
        %v535 = vpop.f32.mrb[0].mxu0
        %536 = vdwg.mxu0
        %v539 = vunpack.c.l.s4 1966171168
        %v540 = vunpack.c.0.s8 %v539
        %v541 = vlaneseq
        %v542 = vshrl.u32 %v541, 7
        %v543 = vsub.s32 %v540, %v542
        %v544 = vrot.slane %v534, %v543
        %v545 = vcombine.high %v544, %v544
        %v547 = vunpack.c.l.s4 1966171168
        %v548 = vunpack.c.0.s8 %v547
        %v549 = vlaneseq
        %v550 = vshrl.u32 %v549, 7
        %v551 = vsub.s32 %v548, %v550
        %v552 = vrot.slane %v544, %v551
        %v554 = vunpack.c.l.s4 1966171168
        %v555 = vunpack.c.0.s8 %v554
        %v556 = vlaneseq
        %v557 = vshrl.u32 %v556, 7
        %v558 = vsub.s32 %v555, %v557
        %v559 = vrot.slane %v545, %v558
        %v560 = vcombine.high %v552, %v552
        %v561 = vcombine.high %v559, %v559
        %566 = vst.msk [vmem:[%s230 + $0x1] sm:$0x1] %vm364, %v552
        %567 = vst.msk [vmem:[%s230 + $0x9] sm:$0x1] %vm364, %v559
        %568 = vst.msk [vmem:[%s230 + $0x11] sm:$0x1] %vm364, %v560
        %569 = vst.msk [vmem:[%s230 + $0x19] sm:$0x1] %vm364, %v561
        %v570 = vld [vmem:[%s234] sm:$0xf]
        %571 = vrot.lane.b32.xlu0 %v534, 120
        %v572 = vpop.permute.xlu0 %571
        %v574 = vadd.f32 %v570, %v572
        %575 = vst.msk [vmem:[%s234] sm:$0xf] %vm239, %v574
        %v576 = vld [vmem:[%s238] sm:$0xf]
        %v577 = vsel %vm376, %v534, 0
        %579 = vmatprep.subr.mxu0 0.0
        %580 = vmatpush1.xpose.msra.mxu0 %v577
        %581 = vmatprep.subr.mxu0 0.0
        %582 = vmatpush1.xpose.msra.mxu0 0.0
        %583 = vmatprep.subr.mxu0 0.0
        %584 = vmatpush1.xpose.msra.mxu0 0.0
        %585 = vmatprep.subr.mxu0 0.0
        %586 = vmatpush1.xpose.msra.mxu0 0.0
        %587 = vmatprep.subr.mxu0 0.0
        %588 = vmatpush1.xpose.msra.mxu0 0.0
        %589 = vmatprep.subr.mxu0 0.0
        %590 = vmatpush1.xpose.msra.mxu0 0.0
        %591 = vmatprep.subr.mxu0 0.0
        %592 = vmatpush1.xpose.msra.mxu0 0.0
        %593 = vmatprep.subr.mxu0 0.0
        %594 = vmatpush1.xpose.msra.mxu0 0.0
        %595 = vmatprep.subr.mxu0 0.0
        %596 = vmatpush1.xpose.msra.mxu0 0.0
        %597 = vmatprep.subr.mxu0 0.0
        %598 = vmatpush1.xpose.msra.mxu0 0.0
        %599 = vmatprep.subr.mxu0 0.0
        %600 = vmatpush1.xpose.msra.mxu0 0.0
        %601 = vmatprep.subr.mxu0 0.0
        %602 = vmatpush1.xpose.msra.mxu0 0.0
        %603 = vmatprep.subr.mxu0 0.0
        %604 = vmatpush1.xpose.msra.mxu0 0.0
        %605 = vmatprep.subr.mxu0 0.0
        %606 = vmatpush1.xpose.msra.mxu0 0.0
        %607 = vmatprep.subr.mxu0 0.0
        %608 = vmatpush1.xpose.msra.mxu0 0.0
        %609 = vmatprep.subr.mxu0 0.0
        %610 = vmatpush1.xpose.msra.mxu0 0.0
        %611 = vmatprep.subr.mxu0 0.0
        %612 = vmatpush1.xpose.msra.mxu0 0.0
        %613 = vmatprep.subr.mxu0 0.0
        %614 = vmatpush1.xpose.msra.mxu0 0.0
        %615 = vmatprep.subr.mxu0 0.0
        %616 = vmatpush1.xpose.msra.mxu0 0.0
        %617 = vmatprep.subr.mxu0 0.0
        %618 = vmatpush1.xpose.msra.mxu0 0.0
        %619 = vmatprep.subr.mxu0 0.0
        %620 = vmatpush1.xpose.msra.mxu0 0.0
        %621 = vmatprep.subr.mxu0 0.0
        %622 = vmatpush1.xpose.msra.mxu0 0.0
        %623 = vmatprep.subr.mxu0 0.0
        %624 = vmatpush1.xpose.msra.mxu0 0.0
        %625 = vmatprep.subr.mxu0 0.0
        %626 = vmatpush1.xpose.msra.mxu0 0.0
        %627 = vmatprep.subr.mxu0 0.0
        %628 = vmatpush1.xpose.msra.mxu0 0.0
        %629 = vmatprep.subr.mxu0 0.0
        %630 = vmatpush1.xpose.msra.mxu0 0.0
        %631 = vmatprep.subr.mxu0 0.0
        %632 = vmatpush1.xpose.msra.mxu0 0.0
        %633 = vmatprep.subr.mxu0 0.0
        %634 = vmatpush1.xpose.msra.mxu0 0.0
        %635 = vmatprep.subr.mxu0 0.0
        %636 = vmatpush1.xpose.msra.mxu0 0.0
        %637 = vmatprep.subr.mxu0 0.0
        %638 = vmatpush1.xpose.msra.mxu0 0.0
        %639 = vmatprep.subr.mxu0 0.0
        %640 = vmatpush1.xpose.msra.mxu0 0.0
        %641 = vmatprep.subr.mxu0 0.0
        %642 = vmatpush1.xpose.msra.mxu0 0.0
        %643 = vmatprep.mubr.f32.mxu0 0.0
        %644 = vmatmul.mubr.f32.gmra.mrb[0].mxu0 %v577
        %v645 = vpop.f32.mrb[0].mxu0
        %v646 = vadd.f32 0.0, %v645
        %v647 = vpop.f32.mrb[0].mxu0
        %648 = vdwg.mxu0
        %v649 = vadd.f32 %v576, %v646
        %650 = vst.msk [vmem:[%s238] sm:$0xf] %vm241, %v649
        %v651 = vld [vmem:[%s193 + $0x4] sm:$0x1]
        %v652 = vld [vmem:[%s193 + $0x14] sm:$0x1]
        %v653 = vld [vmem:[%s193 + $0x24] sm:$0x1]
        %v654 = vld [vmem:[%s193 + $0x34] sm:$0x1]
        %v659 = vrot.slane %v652, 7
        %v660 = vsel %vm254, %v659, %v651
        %v661 = vrot.slane %v653, 6
        %v662 = vsel %vm257, %v661, %v660
        %v663 = vrot.slane %v654, 5
        %v664 = vsel %vm260, %v663, %v662
        %v665 = vsel %vm262, %v664, 0
        %667 = vmatprep.subr.mxu0 0.0
        %668 = vmatpush1.msra.mxu0 %v243
        %669 = vmatprep.subr.mxu0 0.0
        %670 = vmatpush1.msra.mxu0 %v244
        %671 = vmatprep.subr.mxu0 0.0
        %672 = vmatpush1.msra.mxu0 0.0
        %673 = vmatprep.subr.mxu0 0.0
        %674 = vmatpush1.msra.mxu0 0.0
        %675 = vmatprep.subr.mxu0 0.0
        %676 = vmatpush1.msra.mxu0 0.0
        %677 = vmatprep.subr.mxu0 0.0
        %678 = vmatpush1.msra.mxu0 0.0
        %679 = vmatprep.subr.mxu0 0.0
        %680 = vmatpush1.msra.mxu0 0.0
        %681 = vmatprep.subr.mxu0 0.0
        %682 = vmatpush1.msra.mxu0 0.0
        %683 = vmatprep.subr.mxu0 0.0
        %684 = vmatpush1.msra.mxu0 0.0
        %685 = vmatprep.subr.mxu0 0.0
        %686 = vmatpush1.msra.mxu0 0.0
        %687 = vmatprep.subr.mxu0 0.0
        %688 = vmatpush1.msra.mxu0 0.0
        %689 = vmatprep.subr.mxu0 0.0
        %690 = vmatpush1.msra.mxu0 0.0
        %691 = vmatprep.subr.mxu0 0.0
        %692 = vmatpush1.msra.mxu0 0.0
        %693 = vmatprep.subr.mxu0 0.0
        %694 = vmatpush1.msra.mxu0 0.0
        %695 = vmatprep.subr.mxu0 0.0
        %696 = vmatpush1.msra.mxu0 0.0
        %697 = vmatprep.subr.mxu0 0.0
        %698 = vmatpush1.msra.mxu0 0.0
        %699 = vmatprep.subr.mxu0 0.0
        %700 = vmatpush1.msra.mxu0 0.0
        %701 = vmatprep.subr.mxu0 0.0
        %702 = vmatpush1.msra.mxu0 0.0
        %703 = vmatprep.subr.mxu0 0.0
        %704 = vmatpush1.msra.mxu0 0.0
        %705 = vmatprep.subr.mxu0 0.0
        %706 = vmatpush1.msra.mxu0 0.0
        %707 = vmatprep.subr.mxu0 0.0
        %708 = vmatpush1.msra.mxu0 0.0
        %709 = vmatprep.subr.mxu0 0.0
        %710 = vmatpush1.msra.mxu0 0.0
        %711 = vmatprep.subr.mxu0 0.0
        %712 = vmatpush1.msra.mxu0 0.0
        %713 = vmatprep.subr.mxu0 0.0
        %714 = vmatpush1.msra.mxu0 0.0
        %715 = vmatprep.subr.mxu0 0.0
        %716 = vmatpush1.msra.mxu0 0.0
        %717 = vmatprep.subr.mxu0 0.0
        %718 = vmatpush1.msra.mxu0 0.0
        %719 = vmatprep.subr.mxu0 0.0
        %720 = vmatpush1.msra.mxu0 0.0
        %721 = vmatprep.subr.mxu0 0.0
        %722 = vmatpush1.msra.mxu0 0.0
        %723 = vmatprep.subr.mxu0 0.0
        %724 = vmatpush1.msra.mxu0 0.0
        %725 = vmatprep.subr.mxu0 0.0
        %726 = vmatpush1.msra.mxu0 0.0
        %727 = vmatprep.subr.mxu0 0.0
        %728 = vmatpush1.msra.mxu0 0.0
        %729 = vmatprep.subr.mxu0 0.0
        %730 = vmatpush1.msra.mxu0 0.0
        %731 = vmatprep.mubr.f32.mxu0 0.0
        %732 = vmatmul.mubr.f32.gmra.mrb[0].mxu0 %v665
        %v733 = vpop.f32.mrb[0].mxu0
        %v734 = vadd.f32 0.0, %v733
        %v735 = vpop.f32.mrb[0].mxu0
        %736 = vdwg.mxu0
        %v739 = vunpack.c.l.s4 1966171168
        %v740 = vunpack.c.0.s8 %v739
        %v741 = vlaneseq
        %v742 = vshrl.u32 %v741, 7
        %v743 = vsub.s32 %v740, %v742
        %v744 = vrot.slane %v734, %v743
        %v745 = vcombine.high %v744, %v744
        %v747 = vunpack.c.l.s4 1966171168
        %v748 = vunpack.c.0.s8 %v747
        %v749 = vlaneseq
        %v750 = vshrl.u32 %v749, 7
        %v751 = vsub.s32 %v748, %v750
        %v752 = vrot.slane %v744, %v751
        %v754 = vunpack.c.l.s4 1966171168
        %v755 = vunpack.c.0.s8 %v754
        %v756 = vlaneseq
        %v757 = vshrl.u32 %v756, 7
        %v758 = vsub.s32 %v755, %v757
        %v759 = vrot.slane %v745, %v758
        %v760 = vcombine.high %v752, %v752
        %v761 = vcombine.high %v759, %v759
        %766 = vst.msk [vmem:[%s230 + $0x2] sm:$0x1] %vm364, %v752
        %767 = vst.msk [vmem:[%s230 + $0xa] sm:$0x1] %vm364, %v759
        %768 = vst.msk [vmem:[%s230 + $0x12] sm:$0x1] %vm364, %v760
        %769 = vst.msk [vmem:[%s230 + $0x1a] sm:$0x1] %vm364, %v761
        %v770 = vld [vmem:[%s234] sm:$0xf]
        %771 = vrot.lane.b32.xlu0 %v734, 120
        %v772 = vpop.permute.xlu0 %771
        %v774 = vadd.f32 %v770, %v772
        %775 = vst.msk [vmem:[%s234] sm:$0xf] %vm239, %v774
        %v776 = vld [vmem:[%s238] sm:$0xf]
        %v777 = vsel %vm376, %v734, 0
        %779 = vmatprep.subr.mxu0 0.0
        %780 = vmatpush1.xpose.msra.mxu0 %v777
        %781 = vmatprep.subr.mxu0 0.0
        %782 = vmatpush1.xpose.msra.mxu0 0.0
        %783 = vmatprep.subr.mxu0 0.0
        %784 = vmatpush1.xpose.msra.mxu0 0.0
        %785 = vmatprep.subr.mxu0 0.0
        %786 = vmatpush1.xpose.msra.mxu0 0.0
        %787 = vmatprep.subr.mxu0 0.0
        %788 = vmatpush1.xpose.msra.mxu0 0.0
        %789 = vmatprep.subr.mxu0 0.0
        %790 = vmatpush1.xpose.msra.mxu0 0.0
        %791 = vmatprep.subr.mxu0 0.0
        %792 = vmatpush1.xpose.msra.mxu0 0.0
        %793 = vmatprep.subr.mxu0 0.0
        %794 = vmatpush1.xpose.msra.mxu0 0.0
        %795 = vmatprep.subr.mxu0 0.0
        %796 = vmatpush1.xpose.msra.mxu0 0.0
        %797 = vmatprep.subr.mxu0 0.0
        %798 = vmatpush1.xpose.msra.mxu0 0.0
        %799 = vmatprep.subr.mxu0 0.0
        %800 = vmatpush1.xpose.msra.mxu0 0.0
        %801 = vmatprep.subr.mxu0 0.0
        %802 = vmatpush1.xpose.msra.mxu0 0.0
        %803 = vmatprep.subr.mxu0 0.0
        %804 = vmatpush1.xpose.msra.mxu0 0.0
        %805 = vmatprep.subr.mxu0 0.0
        %806 = vmatpush1.xpose.msra.mxu0 0.0
        %807 = vmatprep.subr.mxu0 0.0
        %808 = vmatpush1.xpose.msra.mxu0 0.0
        %809 = vmatprep.subr.mxu0 0.0
        %810 = vmatpush1.xpose.msra.mxu0 0.0
        %811 = vmatprep.subr.mxu0 0.0
        %812 = vmatpush1.xpose.msra.mxu0 0.0
        %813 = vmatprep.subr.mxu0 0.0
        %814 = vmatpush1.xpose.msra.mxu0 0.0
        %815 = vmatprep.subr.mxu0 0.0
        %816 = vmatpush1.xpose.msra.mxu0 0.0
        %817 = vmatprep.subr.mxu0 0.0
        %818 = vmatpush1.xpose.msra.mxu0 0.0
        %819 = vmatprep.subr.mxu0 0.0
        %820 = vmatpush1.xpose.msra.mxu0 0.0
        %821 = vmatprep.subr.mxu0 0.0
        %822 = vmatpush1.xpose.msra.mxu0 0.0
        %823 = vmatprep.subr.mxu0 0.0
        %824 = vmatpush1.xpose.msra.mxu0 0.0
        %825 = vmatprep.subr.mxu0 0.0
        %826 = vmatpush1.xpose.msra.mxu0 0.0
        %827 = vmatprep.subr.mxu0 0.0
        %828 = vmatpush1.xpose.msra.mxu0 0.0
        %829 = vmatprep.subr.mxu0 0.0
        %830 = vmatpush1.xpose.msra.mxu0 0.0
        %831 = vmatprep.subr.mxu0 0.0
        %832 = vmatpush1.xpose.msra.mxu0 0.0
        %833 = vmatprep.subr.mxu0 0.0
        %834 = vmatpush1.xpose.msra.mxu0 0.0
        %835 = vmatprep.subr.mxu0 0.0
        %836 = vmatpush1.xpose.msra.mxu0 0.0
        %837 = vmatprep.subr.mxu0 0.0
        %838 = vmatpush1.xpose.msra.mxu0 0.0
        %839 = vmatprep.subr.mxu0 0.0
        %840 = vmatpush1.xpose.msra.mxu0 0.0
        %841 = vmatprep.subr.mxu0 0.0
        %842 = vmatpush1.xpose.msra.mxu0 0.0
        %843 = vmatprep.mubr.f32.mxu0 0.0
        %844 = vmatmul.mubr.f32.gmra.mrb[0].mxu0 %v777
        %v845 = vpop.f32.mrb[0].mxu0
        %v846 = vadd.f32 0.0, %v845
        %v847 = vpop.f32.mrb[0].mxu0
        %848 = vdwg.mxu0
        %v849 = vadd.f32 %v776, %v846
        %850 = vst.msk [vmem:[%s238] sm:$0xf] %vm241, %v849
        %v851 = vld [vmem:[%s193 + $0x6] sm:$0x1]
        %v852 = vld [vmem:[%s193 + $0x16] sm:$0x1]
        %v853 = vld [vmem:[%s193 + $0x26] sm:$0x1]
        %v854 = vld [vmem:[%s193 + $0x36] sm:$0x1]
        %v859 = vrot.slane %v852, 7
        %v860 = vsel %vm254, %v859, %v851
        %v861 = vrot.slane %v853, 6
        %v862 = vsel %vm257, %v861, %v860
        %v863 = vrot.slane %v854, 5
        %v864 = vsel %vm260, %v863, %v862
        %v865 = vsel %vm262, %v864, 0
        %867 = vmatprep.subr.mxu0 0.0
        %868 = vmatpush1.msra.mxu0 %v243
        %869 = vmatprep.subr.mxu0 0.0
        %870 = vmatpush1.msra.mxu0 %v244
        %871 = vmatprep.subr.mxu0 0.0
        %872 = vmatpush1.msra.mxu0 0.0
        %873 = vmatprep.subr.mxu0 0.0
        %874 = vmatpush1.msra.mxu0 0.0
        %875 = vmatprep.subr.mxu0 0.0
        %876 = vmatpush1.msra.mxu0 0.0
        %877 = vmatprep.subr.mxu0 0.0
        %878 = vmatpush1.msra.mxu0 0.0
        %879 = vmatprep.subr.mxu0 0.0
        %880 = vmatpush1.msra.mxu0 0.0
        %881 = vmatprep.subr.mxu0 0.0
        %882 = vmatpush1.msra.mxu0 0.0
        %883 = vmatprep.subr.mxu0 0.0
        %884 = vmatpush1.msra.mxu0 0.0
        %885 = vmatprep.subr.mxu0 0.0
        %886 = vmatpush1.msra.mxu0 0.0
        %887 = vmatprep.subr.mxu0 0.0
        %888 = vmatpush1.msra.mxu0 0.0
        %889 = vmatprep.subr.mxu0 0.0
        %890 = vmatpush1.msra.mxu0 0.0
        %891 = vmatprep.subr.mxu0 0.0
        %892 = vmatpush1.msra.mxu0 0.0
        %893 = vmatprep.subr.mxu0 0.0
        %894 = vmatpush1.msra.mxu0 0.0
        %895 = vmatprep.subr.mxu0 0.0
        %896 = vmatpush1.msra.mxu0 0.0
        %897 = vmatprep.subr.mxu0 0.0
        %898 = vmatpush1.msra.mxu0 0.0
        %899 = vmatprep.subr.mxu0 0.0
        %900 = vmatpush1.msra.mxu0 0.0
        %901 = vmatprep.subr.mxu0 0.0
        %902 = vmatpush1.msra.mxu0 0.0
        %903 = vmatprep.subr.mxu0 0.0
        %904 = vmatpush1.msra.mxu0 0.0
        %905 = vmatprep.subr.mxu0 0.0
        %906 = vmatpush1.msra.mxu0 0.0
        %907 = vmatprep.subr.mxu0 0.0
        %908 = vmatpush1.msra.mxu0 0.0
        %909 = vmatprep.subr.mxu0 0.0
        %910 = vmatpush1.msra.mxu0 0.0
        %911 = vmatprep.subr.mxu0 0.0
        %912 = vmatpush1.msra.mxu0 0.0
        %913 = vmatprep.subr.mxu0 0.0
        %914 = vmatpush1.msra.mxu0 0.0
        %915 = vmatprep.subr.mxu0 0.0
        %916 = vmatpush1.msra.mxu0 0.0
        %917 = vmatprep.subr.mxu0 0.0
        %918 = vmatpush1.msra.mxu0 0.0
        %919 = vmatprep.subr.mxu0 0.0
        %920 = vmatpush1.msra.mxu0 0.0
        %921 = vmatprep.subr.mxu0 0.0
        %922 = vmatpush1.msra.mxu0 0.0
        %923 = vmatprep.subr.mxu0 0.0
        %924 = vmatpush1.msra.mxu0 0.0
        %925 = vmatprep.subr.mxu0 0.0
        %926 = vmatpush1.msra.mxu0 0.0
        %927 = vmatprep.subr.mxu0 0.0
        %928 = vmatpush1.msra.mxu0 0.0
        %929 = vmatprep.subr.mxu0 0.0
        %930 = vmatpush1.msra.mxu0 0.0
        %931 = vmatprep.mubr.f32.mxu0 0.0
        %932 = vmatmul.mubr.f32.gmra.mrb[0].mxu0 %v865
        %v933 = vpop.f32.mrb[0].mxu0
        %v934 = vadd.f32 0.0, %v933
        %v935 = vpop.f32.mrb[0].mxu0
        %936 = vdwg.mxu0
        %v939 = vunpack.c.l.s4 1966171168
        %v940 = vunpack.c.0.s8 %v939
        %v941 = vlaneseq
        %v942 = vshrl.u32 %v941, 7
        %v943 = vsub.s32 %v940, %v942
        %v944 = vrot.slane %v934, %v943
        %v945 = vcombine.high %v944, %v944
        %v947 = vunpack.c.l.s4 1966171168
        %v948 = vunpack.c.0.s8 %v947
        %v949 = vlaneseq
        %v950 = vshrl.u32 %v949, 7
        %v951 = vsub.s32 %v948, %v950
        %v952 = vrot.slane %v944, %v951
        %v954 = vunpack.c.l.s4 1966171168
        %v955 = vunpack.c.0.s8 %v954
        %v956 = vlaneseq
        %v957 = vshrl.u32 %v956, 7
        %v958 = vsub.s32 %v955, %v957
        %v959 = vrot.slane %v945, %v958
        %v960 = vcombine.high %v952, %v952
        %v961 = vcombine.high %v959, %v959
        %966 = vst.msk [vmem:[%s230 + $0x3] sm:$0x1] %vm364, %v952
        %967 = vst.msk [vmem:[%s230 + $0xb] sm:$0x1] %vm364, %v959
        %968 = vst.msk [vmem:[%s230 + $0x13] sm:$0x1] %vm364, %v960
        %969 = vst.msk [vmem:[%s230 + $0x1b] sm:$0x1] %vm364, %v961
        %v970 = vld [vmem:[%s234] sm:$0xf]
        %971 = vrot.lane.b32.xlu0 %v934, 120
        %v972 = vpop.permute.xlu0 %971
        %v974 = vadd.f32 %v970, %v972
        %975 = vst.msk [vmem:[%s234] sm:$0xf] %vm239, %v974
        %v976 = vld [vmem:[%s238] sm:$0xf]
        %v977 = vsel %vm376, %v934, 0
        %979 = vmatprep.subr.mxu0 0.0
        %980 = vmatpush1.xpose.msra.mxu0 %v977
        %981 = vmatprep.subr.mxu0 0.0
        %982 = vmatpush1.xpose.msra.mxu0 0.0
        %983 = vmatprep.subr.mxu0 0.0
        %984 = vmatpush1.xpose.msra.mxu0 0.0
        %985 = vmatprep.subr.mxu0 0.0
        %986 = vmatpush1.xpose.msra.mxu0 0.0
        %987 = vmatprep.subr.mxu0 0.0
        %988 = vmatpush1.xpose.msra.mxu0 0.0
        %989 = vmatprep.subr.mxu0 0.0
        %990 = vmatpush1.xpose.msra.mxu0 0.0
        %991 = vmatprep.subr.mxu0 0.0
        %992 = vmatpush1.xpose.msra.mxu0 0.0
        %993 = vmatprep.subr.mxu0 0.0
        %994 = vmatpush1.xpose.msra.mxu0 0.0
        %995 = vmatprep.subr.mxu0 0.0
        %996 = vmatpush1.xpose.msra.mxu0 0.0
        %997 = vmatprep.subr.mxu0 0.0
        %998 = vmatpush1.xpose.msra.mxu0 0.0
        %999 = vmatprep.subr.mxu0 0.0
        %1000 = vmatpush1.xpose.msra.mxu0 0.0
        %1001 = vmatprep.subr.mxu0 0.0
        %1002 = vmatpush1.xpose.msra.mxu0 0.0
        %1003 = vmatprep.subr.mxu0 0.0
        %1004 = vmatpush1.xpose.msra.mxu0 0.0
        %1005 = vmatprep.subr.mxu0 0.0
        %1006 = vmatpush1.xpose.msra.mxu0 0.0
        %1007 = vmatprep.subr.mxu0 0.0
        %1008 = vmatpush1.xpose.msra.mxu0 0.0
        %1009 = vmatprep.subr.mxu0 0.0
        %1010 = vmatpush1.xpose.msra.mxu0 0.0
        %1011 = vmatprep.subr.mxu0 0.0
        %1012 = vmatpush1.xpose.msra.mxu0 0.0
        %1013 = vmatprep.subr.mxu0 0.0
        %1014 = vmatpush1.xpose.msra.mxu0 0.0
        %1015 = vmatprep.subr.mxu0 0.0
        %1016 = vmatpush1.xpose.msra.mxu0 0.0
        %1017 = vmatprep.subr.mxu0 0.0
        %1018 = vmatpush1.xpose.msra.mxu0 0.0
        %1019 = vmatprep.subr.mxu0 0.0
        %1020 = vmatpush1.xpose.msra.mxu0 0.0
        %1021 = vmatprep.subr.mxu0 0.0
        %1022 = vmatpush1.xpose.msra.mxu0 0.0
        %1023 = vmatprep.subr.mxu0 0.0
        %1024 = vmatpush1.xpose.msra.mxu0 0.0
        %1025 = vmatprep.subr.mxu0 0.0
        %1026 = vmatpush1.xpose.msra.mxu0 0.0
        %1027 = vmatprep.subr.mxu0 0.0
        %1028 = vmatpush1.xpose.msra.mxu0 0.0
        %1029 = vmatprep.subr.mxu0 0.0
        %1030 = vmatpush1.xpose.msra.mxu0 0.0
        %1031 = vmatprep.subr.mxu0 0.0
        %1032 = vmatpush1.xpose.msra.mxu0 0.0
        %1033 = vmatprep.subr.mxu0 0.0
        %1034 = vmatpush1.xpose.msra.mxu0 0.0
        %1035 = vmatprep.subr.mxu0 0.0
        %1036 = vmatpush1.xpose.msra.mxu0 0.0
        %1037 = vmatprep.subr.mxu0 0.0
        %1038 = vmatpush1.xpose.msra.mxu0 0.0
        %1039 = vmatprep.subr.mxu0 0.0
        %1040 = vmatpush1.xpose.msra.mxu0 0.0
        %1041 = vmatprep.subr.mxu0 0.0
        %1042 = vmatpush1.xpose.msra.mxu0 0.0
        %1043 = vmatprep.mubr.f32.mxu0 0.0
        %1044 = vmatmul.mubr.f32.gmra.mrb[0].mxu0 %v977
        %v1045 = vpop.f32.mrb[0].mxu0
        %v1046 = vadd.f32 0.0, %v1045
        %v1047 = vpop.f32.mrb[0].mxu0
        %1048 = vdwg.mxu0
        %v1049 = vadd.f32 %v976, %v1046
        %1050 = vst.msk [vmem:[%s238] sm:$0xf] %vm241, %v1049
        %v1051 = vld [vmem:[%s193 + $0x8] sm:$0x1]
        %v1052 = vld [vmem:[%s193 + $0x18] sm:$0x1]
        %v1053 = vld [vmem:[%s193 + $0x28] sm:$0x1]
        %v1054 = vld [vmem:[%s193 + $0x38] sm:$0x1]
        %v1059 = vrot.slane %v1052, 7
        %v1060 = vsel %vm254, %v1059, %v1051
        %v1061 = vrot.slane %v1053, 6
        %v1062 = vsel %vm257, %v1061, %v1060
        %v1063 = vrot.slane %v1054, 5
        %v1064 = vsel %vm260, %v1063, %v1062
        %v1065 = vsel %vm262, %v1064, 0
        %1067 = vmatprep.subr.mxu0 0.0
        %1068 = vmatpush1.msra.mxu0 %v243
        %1069 = vmatprep.subr.mxu0 0.0
        %1070 = vmatpush1.msra.mxu0 %v244
        %1071 = vmatprep.subr.mxu0 0.0
        %1072 = vmatpush1.msra.mxu0 0.0
        %1073 = vmatprep.subr.mxu0 0.0
        %1074 = vmatpush1.msra.mxu0 0.0
        %1075 = vmatprep.subr.mxu0 0.0
        %1076 = vmatpush1.msra.mxu0 0.0
        %1077 = vmatprep.subr.mxu0 0.0
        %1078 = vmatpush1.msra.mxu0 0.0
        %1079 = vmatprep.subr.mxu0 0.0
        %1080 = vmatpush1.msra.mxu0 0.0
        %1081 = vmatprep.subr.mxu0 0.0
        %1082 = vmatpush1.msra.mxu0 0.0
        %1083 = vmatprep.subr.mxu0 0.0
        %1084 = vmatpush1.msra.mxu0 0.0
        %1085 = vmatprep.subr.mxu0 0.0
        %1086 = vmatpush1.msra.mxu0 0.0
        %1087 = vmatprep.subr.mxu0 0.0
        %1088 = vmatpush1.msra.mxu0 0.0
        %1089 = vmatprep.subr.mxu0 0.0
        %1090 = vmatpush1.msra.mxu0 0.0
        %1091 = vmatprep.subr.mxu0 0.0
        %1092 = vmatpush1.msra.mxu0 0.0
        %1093 = vmatprep.subr.mxu0 0.0
        %1094 = vmatpush1.msra.mxu0 0.0
        %1095 = vmatprep.subr.mxu0 0.0
        %1096 = vmatpush1.msra.mxu0 0.0
        %1097 = vmatprep.subr.mxu0 0.0
        %1098 = vmatpush1.msra.mxu0 0.0
        %1099 = vmatprep.subr.mxu0 0.0
        %1100 = vmatpush1.msra.mxu0 0.0
        %1101 = vmatprep.subr.mxu0 0.0
        %1102 = vmatpush1.msra.mxu0 0.0
        %1103 = vmatprep.subr.mxu0 0.0
        %1104 = vmatpush1.msra.mxu0 0.0
        %1105 = vmatprep.subr.mxu0 0.0
        %1106 = vmatpush1.msra.mxu0 0.0
        %1107 = vmatprep.subr.mxu0 0.0
        %1108 = vmatpush1.msra.mxu0 0.0
        %1109 = vmatprep.subr.mxu0 0.0
        %1110 = vmatpush1.msra.mxu0 0.0
        %1111 = vmatprep.subr.mxu0 0.0
        %1112 = vmatpush1.msra.mxu0 0.0
        %1113 = vmatprep.subr.mxu0 0.0
        %1114 = vmatpush1.msra.mxu0 0.0
        %1115 = vmatprep.subr.mxu0 0.0
        %1116 = vmatpush1.msra.mxu0 0.0
        %1117 = vmatprep.subr.mxu0 0.0
        %1118 = vmatpush1.msra.mxu0 0.0
        %1119 = vmatprep.subr.mxu0 0.0
        %1120 = vmatpush1.msra.mxu0 0.0
        %1121 = vmatprep.subr.mxu0 0.0
        %1122 = vmatpush1.msra.mxu0 0.0
        %1123 = vmatprep.subr.mxu0 0.0
        %1124 = vmatpush1.msra.mxu0 0.0
        %1125 = vmatprep.subr.mxu0 0.0
        %1126 = vmatpush1.msra.mxu0 0.0
        %1127 = vmatprep.subr.mxu0 0.0
        %1128 = vmatpush1.msra.mxu0 0.0
        %1129 = vmatprep.subr.mxu0 0.0
        %1130 = vmatpush1.msra.mxu0 0.0
        %1131 = vmatprep.mubr.f32.mxu0 0.0
        %1132 = vmatmul.mubr.f32.gmra.mrb[0].mxu0 %v1065
        %v1133 = vpop.f32.mrb[0].mxu0
        %v1134 = vadd.f32 0.0, %v1133
        %v1135 = vpop.f32.mrb[0].mxu0
        %1136 = vdwg.mxu0
        %v1139 = vunpack.c.l.s4 1966171168
        %v1140 = vunpack.c.0.s8 %v1139
        %v1141 = vlaneseq
        %v1142 = vshrl.u32 %v1141, 7
        %v1143 = vsub.s32 %v1140, %v1142
        %v1144 = vrot.slane %v1134, %v1143
        %v1145 = vcombine.high %v1144, %v1144
        %v1147 = vunpack.c.l.s4 1966171168
        %v1148 = vunpack.c.0.s8 %v1147
        %v1149 = vlaneseq
        %v1150 = vshrl.u32 %v1149, 7
        %v1151 = vsub.s32 %v1148, %v1150
        %v1152 = vrot.slane %v1144, %v1151
        %v1154 = vunpack.c.l.s4 1966171168
        %v1155 = vunpack.c.0.s8 %v1154
        %v1156 = vlaneseq
        %v1157 = vshrl.u32 %v1156, 7
        %v1158 = vsub.s32 %v1155, %v1157
        %v1159 = vrot.slane %v1145, %v1158
        %v1160 = vcombine.high %v1152, %v1152
        %v1161 = vcombine.high %v1159, %v1159
        %1166 = vst.msk [vmem:[%s230 + $0x4] sm:$0x1] %vm364, %v1152
        %1167 = vst.msk [vmem:[%s230 + $0xc] sm:$0x1] %vm364, %v1159
        %1168 = vst.msk [vmem:[%s230 + $0x14] sm:$0x1] %vm364, %v1160
        %1169 = vst.msk [vmem:[%s230 + $0x1c] sm:$0x1] %vm364, %v1161
        %v1170 = vld [vmem:[%s234] sm:$0xf]
        %1171 = vrot.lane.b32.xlu0 %v1134, 120
        %v1172 = vpop.permute.xlu0 %1171
        %v1174 = vadd.f32 %v1170, %v1172
        %1175 = vst.msk [vmem:[%s234] sm:$0xf] %vm239, %v1174
        %v1176 = vld [vmem:[%s238] sm:$0xf]
        %v1177 = vsel %vm376, %v1134, 0
        %1179 = vmatprep.subr.mxu0 0.0
        %1180 = vmatpush1.xpose.msra.mxu0 %v1177
        %1181 = vmatprep.subr.mxu0 0.0
        %1182 = vmatpush1.xpose.msra.mxu0 0.0
        %1183 = vmatprep.subr.mxu0 0.0
        %1184 = vmatpush1.xpose.msra.mxu0 0.0
        %1185 = vmatprep.subr.mxu0 0.0
        %1186 = vmatpush1.xpose.msra.mxu0 0.0
        %1187 = vmatprep.subr.mxu0 0.0
        %1188 = vmatpush1.xpose.msra.mxu0 0.0
        %1189 = vmatprep.subr.mxu0 0.0
        %1190 = vmatpush1.xpose.msra.mxu0 0.0
        %1191 = vmatprep.subr.mxu0 0.0
        %1192 = vmatpush1.xpose.msra.mxu0 0.0
        %1193 = vmatprep.subr.mxu0 0.0
        %1194 = vmatpush1.xpose.msra.mxu0 0.0
        %1195 = vmatprep.subr.mxu0 0.0
        %1196 = vmatpush1.xpose.msra.mxu0 0.0
        %1197 = vmatprep.subr.mxu0 0.0
        %1198 = vmatpush1.xpose.msra.mxu0 0.0
        %1199 = vmatprep.subr.mxu0 0.0
        %1200 = vmatpush1.xpose.msra.mxu0 0.0
        %1201 = vmatprep.subr.mxu0 0.0
        %1202 = vmatpush1.xpose.msra.mxu0 0.0
        %1203 = vmatprep.subr.mxu0 0.0
        %1204 = vmatpush1.xpose.msra.mxu0 0.0
        %1205 = vmatprep.subr.mxu0 0.0
        %1206 = vmatpush1.xpose.msra.mxu0 0.0
        %1207 = vmatprep.subr.mxu0 0.0
        %1208 = vmatpush1.xpose.msra.mxu0 0.0
        %1209 = vmatprep.subr.mxu0 0.0
        %1210 = vmatpush1.xpose.msra.mxu0 0.0
        %1211 = vmatprep.subr.mxu0 0.0
        %1212 = vmatpush1.xpose.msra.mxu0 0.0
        %1213 = vmatprep.subr.mxu0 0.0
        %1214 = vmatpush1.xpose.msra.mxu0 0.0
        %1215 = vmatprep.subr.mxu0 0.0
        %1216 = vmatpush1.xpose.msra.mxu0 0.0
        %1217 = vmatprep.subr.mxu0 0.0
        %1218 = vmatpush1.xpose.msra.mxu0 0.0
        %1219 = vmatprep.subr.mxu0 0.0
        %1220 = vmatpush1.xpose.msra.mxu0 0.0
        %1221 = vmatprep.subr.mxu0 0.0
        %1222 = vmatpush1.xpose.msra.mxu0 0.0
        %1223 = vmatprep.subr.mxu0 0.0
        %1224 = vmatpush1.xpose.msra.mxu0 0.0
        %1225 = vmatprep.subr.mxu0 0.0
        %1226 = vmatpush1.xpose.msra.mxu0 0.0
        %1227 = vmatprep.subr.mxu0 0.0
        %1228 = vmatpush1.xpose.msra.mxu0 0.0
        %1229 = vmatprep.subr.mxu0 0.0
        %1230 = vmatpush1.xpose.msra.mxu0 0.0
        %1231 = vmatprep.subr.mxu0 0.0
        %1232 = vmatpush1.xpose.msra.mxu0 0.0
        %1233 = vmatprep.subr.mxu0 0.0
        %1234 = vmatpush1.xpose.msra.mxu0 0.0
        %1235 = vmatprep.subr.mxu0 0.0
        %1236 = vmatpush1.xpose.msra.mxu0 0.0
        %1237 = vmatprep.subr.mxu0 0.0
        %1238 = vmatpush1.xpose.msra.mxu0 0.0
        %1239 = vmatprep.subr.mxu0 0.0
        %1240 = vmatpush1.xpose.msra.mxu0 0.0
        %1241 = vmatprep.subr.mxu0 0.0
        %1242 = vmatpush1.xpose.msra.mxu0 0.0
        %1243 = vmatprep.mubr.f32.mxu0 0.0
        %1244 = vmatmul.mubr.f32.gmra.mrb[0].mxu0 %v1177
        %v1245 = vpop.f32.mrb[0].mxu0
        %v1246 = vadd.f32 0.0, %v1245
        %v1247 = vpop.f32.mrb[0].mxu0
        %1248 = vdwg.mxu0
        %v1249 = vadd.f32 %v1176, %v1246
        %1250 = vst.msk [vmem:[%s238] sm:$0xf] %vm241, %v1249
        %v1251 = vld [vmem:[%s193 + $0xa] sm:$0x1]
        %v1252 = vld [vmem:[%s193 + $0x1a] sm:$0x1]
        %v1253 = vld [vmem:[%s193 + $0x2a] sm:$0x1]
        %v1254 = vld [vmem:[%s193 + $0x3a] sm:$0x1]
        %v1259 = vrot.slane %v1252, 7
        %v1260 = vsel %vm254, %v1259, %v1251
        %v1261 = vrot.slane %v1253, 6
        %v1262 = vsel %vm257, %v1261, %v1260
        %v1263 = vrot.slane %v1254, 5
        %v1264 = vsel %vm260, %v1263, %v1262
        %v1265 = vsel %vm262, %v1264, 0
        %1267 = vmatprep.subr.mxu0 0.0
        %1268 = vmatpush1.msra.mxu0 %v243
        %1269 = vmatprep.subr.mxu0 0.0
        %1270 = vmatpush1.msra.mxu0 %v244
        %1271 = vmatprep.subr.mxu0 0.0
        %1272 = vmatpush1.msra.mxu0 0.0
        %1273 = vmatprep.subr.mxu0 0.0
        %1274 = vmatpush1.msra.mxu0 0.0
        %1275 = vmatprep.subr.mxu0 0.0
        %1276 = vmatpush1.msra.mxu0 0.0
        %1277 = vmatprep.subr.mxu0 0.0
        %1278 = vmatpush1.msra.mxu0 0.0
        %1279 = vmatprep.subr.mxu0 0.0
        %1280 = vmatpush1.msra.mxu0 0.0
        %1281 = vmatprep.subr.mxu0 0.0
        %1282 = vmatpush1.msra.mxu0 0.0
        %1283 = vmatprep.subr.mxu0 0.0
        %1284 = vmatpush1.msra.mxu0 0.0
        %1285 = vmatprep.subr.mxu0 0.0
        %1286 = vmatpush1.msra.mxu0 0.0
        %1287 = vmatprep.subr.mxu0 0.0
        %1288 = vmatpush1.msra.mxu0 0.0
        %1289 = vmatprep.subr.mxu0 0.0
        %1290 = vmatpush1.msra.mxu0 0.0
        %1291 = vmatprep.subr.mxu0 0.0
        %1292 = vmatpush1.msra.mxu0 0.0
        %1293 = vmatprep.subr.mxu0 0.0
        %1294 = vmatpush1.msra.mxu0 0.0
        %1295 = vmatprep.subr.mxu0 0.0
        %1296 = vmatpush1.msra.mxu0 0.0
        %1297 = vmatprep.subr.mxu0 0.0
        %1298 = vmatpush1.msra.mxu0 0.0
        %1299 = vmatprep.subr.mxu0 0.0
        %1300 = vmatpush1.msra.mxu0 0.0
        %1301 = vmatprep.subr.mxu0 0.0
        %1302 = vmatpush1.msra.mxu0 0.0
        %1303 = vmatprep.subr.mxu0 0.0
        %1304 = vmatpush1.msra.mxu0 0.0
        %1305 = vmatprep.subr.mxu0 0.0
        %1306 = vmatpush1.msra.mxu0 0.0
        %1307 = vmatprep.subr.mxu0 0.0
        %1308 = vmatpush1.msra.mxu0 0.0
        %1309 = vmatprep.subr.mxu0 0.0
        %1310 = vmatpush1.msra.mxu0 0.0
        %1311 = vmatprep.subr.mxu0 0.0
        %1312 = vmatpush1.msra.mxu0 0.0
        %1313 = vmatprep.subr.mxu0 0.0
        %1314 = vmatpush1.msra.mxu0 0.0
        %1315 = vmatprep.subr.mxu0 0.0
        %1316 = vmatpush1.msra.mxu0 0.0
        %1317 = vmatprep.subr.mxu0 0.0
        %1318 = vmatpush1.msra.mxu0 0.0
        %1319 = vmatprep.subr.mxu0 0.0
        %1320 = vmatpush1.msra.mxu0 0.0
        %1321 = vmatprep.subr.mxu0 0.0
        %1322 = vmatpush1.msra.mxu0 0.0
        %1323 = vmatprep.subr.mxu0 0.0
        %1324 = vmatpush1.msra.mxu0 0.0
        %1325 = vmatprep.subr.mxu0 0.0
        %1326 = vmatpush1.msra.mxu0 0.0
        %1327 = vmatprep.subr.mxu0 0.0
        %1328 = vmatpush1.msra.mxu0 0.0
        %1329 = vmatprep.subr.mxu0 0.0
        %1330 = vmatpush1.msra.mxu0 0.0
        %1331 = vmatprep.mubr.f32.mxu0 0.0
        %1332 = vmatmul.mubr.f32.gmra.mrb[0].mxu0 %v1265
        %v1333 = vpop.f32.mrb[0].mxu0
        %v1334 = vadd.f32 0.0, %v1333
        %v1335 = vpop.f32.mrb[0].mxu0
        %1336 = vdwg.mxu0
        %v1339 = vunpack.c.l.s4 1966171168
        %v1340 = vunpack.c.0.s8 %v1339
        %v1341 = vlaneseq
        %v1342 = vshrl.u32 %v1341, 7
        %v1343 = vsub.s32 %v1340, %v1342
        %v1344 = vrot.slane %v1334, %v1343
        %v1345 = vcombine.high %v1344, %v1344
        %v1347 = vunpack.c.l.s4 1966171168
        %v1348 = vunpack.c.0.s8 %v1347
        %v1349 = vlaneseq
        %v1350 = vshrl.u32 %v1349, 7
        %v1351 = vsub.s32 %v1348, %v1350
        %v1352 = vrot.slane %v1344, %v1351
        %v1354 = vunpack.c.l.s4 1966171168
        %v1355 = vunpack.c.0.s8 %v1354
        %v1356 = vlaneseq
        %v1357 = vshrl.u32 %v1356, 7
        %v1358 = vsub.s32 %v1355, %v1357
        %v1359 = vrot.slane %v1345, %v1358
        %v1360 = vcombine.high %v1352, %v1352
        %v1361 = vcombine.high %v1359, %v1359
        %1366 = vst.msk [vmem:[%s230 + $0x5] sm:$0x1] %vm364, %v1352
        %1367 = vst.msk [vmem:[%s230 + $0xd] sm:$0x1] %vm364, %v1359
        %1368 = vst.msk [vmem:[%s230 + $0x15] sm:$0x1] %vm364, %v1360
        %1369 = vst.msk [vmem:[%s230 + $0x1d] sm:$0x1] %vm364, %v1361
        %v1370 = vld [vmem:[%s234] sm:$0xf]
        %1371 = vrot.lane.b32.xlu0 %v1334, 120
        %v1372 = vpop.permute.xlu0 %1371
        %v1374 = vadd.f32 %v1370, %v1372
        %1375 = vst.msk [vmem:[%s234] sm:$0xf] %vm239, %v1374
        %v1376 = vld [vmem:[%s238] sm:$0xf]
        %v1377 = vsel %vm376, %v1334, 0
        %1379 = vmatprep.subr.mxu0 0.0
        %1380 = vmatpush1.xpose.msra.mxu0 %v1377
        %1381 = vmatprep.subr.mxu0 0.0
        %1382 = vmatpush1.xpose.msra.mxu0 0.0
        %1383 = vmatprep.subr.mxu0 0.0
        %1384 = vmatpush1.xpose.msra.mxu0 0.0
        %1385 = vmatprep.subr.mxu0 0.0
        %1386 = vmatpush1.xpose.msra.mxu0 0.0
        %1387 = vmatprep.subr.mxu0 0.0
        %1388 = vmatpush1.xpose.msra.mxu0 0.0
        %1389 = vmatprep.subr.mxu0 0.0
        %1390 = vmatpush1.xpose.msra.mxu0 0.0
        %1391 = vmatprep.subr.mxu0 0.0
        %1392 = vmatpush1.xpose.msra.mxu0 0.0
        %1393 = vmatprep.subr.mxu0 0.0
        %1394 = vmatpush1.xpose.msra.mxu0 0.0
        %1395 = vmatprep.subr.mxu0 0.0
        %1396 = vmatpush1.xpose.msra.mxu0 0.0
        %1397 = vmatprep.subr.mxu0 0.0
        %1398 = vmatpush1.xpose.msra.mxu0 0.0
        %1399 = vmatprep.subr.mxu0 0.0
        %1400 = vmatpush1.xpose.msra.mxu0 0.0
        %1401 = vmatprep.subr.mxu0 0.0
        %1402 = vmatpush1.xpose.msra.mxu0 0.0
        %1403 = vmatprep.subr.mxu0 0.0
        %1404 = vmatpush1.xpose.msra.mxu0 0.0
        %1405 = vmatprep.subr.mxu0 0.0
        %1406 = vmatpush1.xpose.msra.mxu0 0.0
        %1407 = vmatprep.subr.mxu0 0.0
        %1408 = vmatpush1.xpose.msra.mxu0 0.0
        %1409 = vmatprep.subr.mxu0 0.0
        %1410 = vmatpush1.xpose.msra.mxu0 0.0
        %1411 = vmatprep.subr.mxu0 0.0
        %1412 = vmatpush1.xpose.msra.mxu0 0.0
        %1413 = vmatprep.subr.mxu0 0.0
        %1414 = vmatpush1.xpose.msra.mxu0 0.0
        %1415 = vmatprep.subr.mxu0 0.0
        %1416 = vmatpush1.xpose.msra.mxu0 0.0
        %1417 = vmatprep.subr.mxu0 0.0
        %1418 = vmatpush1.xpose.msra.mxu0 0.0
        %1419 = vmatprep.subr.mxu0 0.0
        %1420 = vmatpush1.xpose.msra.mxu0 0.0
        %1421 = vmatprep.subr.mxu0 0.0
        %1422 = vmatpush1.xpose.msra.mxu0 0.0
        %1423 = vmatprep.subr.mxu0 0.0
        %1424 = vmatpush1.xpose.msra.mxu0 0.0
        %1425 = vmatprep.subr.mxu0 0.0
        %1426 = vmatpush1.xpose.msra.mxu0 0.0
        %1427 = vmatprep.subr.mxu0 0.0
        %1428 = vmatpush1.xpose.msra.mxu0 0.0
        %1429 = vmatprep.subr.mxu0 0.0
        %1430 = vmatpush1.xpose.msra.mxu0 0.0
        %1431 = vmatprep.subr.mxu0 0.0
        %1432 = vmatpush1.xpose.msra.mxu0 0.0
        %1433 = vmatprep.subr.mxu0 0.0
        %1434 = vmatpush1.xpose.msra.mxu0 0.0
        %1435 = vmatprep.subr.mxu0 0.0
        %1436 = vmatpush1.xpose.msra.mxu0 0.0
        %1437 = vmatprep.subr.mxu0 0.0
        %1438 = vmatpush1.xpose.msra.mxu0 0.0
        %1439 = vmatprep.subr.mxu0 0.0
        %1440 = vmatpush1.xpose.msra.mxu0 0.0
        %1441 = vmatprep.subr.mxu0 0.0
        %1442 = vmatpush1.xpose.msra.mxu0 0.0
        %1443 = vmatprep.mubr.f32.mxu0 0.0
        %1444 = vmatmul.mubr.f32.gmra.mrb[0].mxu0 %v1377
        %v1445 = vpop.f32.mrb[0].mxu0
        %v1446 = vadd.f32 0.0, %v1445
        %v1447 = vpop.f32.mrb[0].mxu0
        %1448 = vdwg.mxu0
        %v1449 = vadd.f32 %v1376, %v1446
        %1450 = vst.msk [vmem:[%s238] sm:$0xf] %vm241, %v1449
        %v1451 = vld [vmem:[%s193 + $0xc] sm:$0x1]
        %v1452 = vld [vmem:[%s193 + $0x1c] sm:$0x1]
        %v1453 = vld [vmem:[%s193 + $0x2c] sm:$0x1]
        %v1454 = vld [vmem:[%s193 + $0x3c] sm:$0x1]
        %v1459 = vrot.slane %v1452, 7
        %v1460 = vsel %vm254, %v1459, %v1451
        %v1461 = vrot.slane %v1453, 6
        %v1462 = vsel %vm257, %v1461, %v1460
        %v1463 = vrot.slane %v1454, 5
        %v1464 = vsel %vm260, %v1463, %v1462
        %v1465 = vsel %vm262, %v1464, 0
        %1467 = vmatprep.subr.mxu0 0.0
        %1468 = vmatpush1.msra.mxu0 %v243
        %1469 = vmatprep.subr.mxu0 0.0
        %1470 = vmatpush1.msra.mxu0 %v244
        %1471 = vmatprep.subr.mxu0 0.0
        %1472 = vmatpush1.msra.mxu0 0.0
        %1473 = vmatprep.subr.mxu0 0.0
        %1474 = vmatpush1.msra.mxu0 0.0
        %1475 = vmatprep.subr.mxu0 0.0
        %1476 = vmatpush1.msra.mxu0 0.0
        %1477 = vmatprep.subr.mxu0 0.0
        %1478 = vmatpush1.msra.mxu0 0.0
        %1479 = vmatprep.subr.mxu0 0.0
        %1480 = vmatpush1.msra.mxu0 0.0
        %1481 = vmatprep.subr.mxu0 0.0
        %1482 = vmatpush1.msra.mxu0 0.0
        %1483 = vmatprep.subr.mxu0 0.0
        %1484 = vmatpush1.msra.mxu0 0.0
        %1485 = vmatprep.subr.mxu0 0.0
        %1486 = vmatpush1.msra.mxu0 0.0
        %1487 = vmatprep.subr.mxu0 0.0
        %1488 = vmatpush1.msra.mxu0 0.0
        %1489 = vmatprep.subr.mxu0 0.0
        %1490 = vmatpush1.msra.mxu0 0.0
        %1491 = vmatprep.subr.mxu0 0.0
        %1492 = vmatpush1.msra.mxu0 0.0
        %1493 = vmatprep.subr.mxu0 0.0
        %1494 = vmatpush1.msra.mxu0 0.0
        %1495 = vmatprep.subr.mxu0 0.0
        %1496 = vmatpush1.msra.mxu0 0.0
        %1497 = vmatprep.subr.mxu0 0.0
        %1498 = vmatpush1.msra.mxu0 0.0
        %1499 = vmatprep.subr.mxu0 0.0
        %1500 = vmatpush1.msra.mxu0 0.0
        %1501 = vmatprep.subr.mxu0 0.0
        %1502 = vmatpush1.msra.mxu0 0.0
        %1503 = vmatprep.subr.mxu0 0.0
        %1504 = vmatpush1.msra.mxu0 0.0
        %1505 = vmatprep.subr.mxu0 0.0
        %1506 = vmatpush1.msra.mxu0 0.0
        %1507 = vmatprep.subr.mxu0 0.0
        %1508 = vmatpush1.msra.mxu0 0.0
        %1509 = vmatprep.subr.mxu0 0.0
        %1510 = vmatpush1.msra.mxu0 0.0
        %1511 = vmatprep.subr.mxu0 0.0
        %1512 = vmatpush1.msra.mxu0 0.0
        %1513 = vmatprep.subr.mxu0 0.0
        %1514 = vmatpush1.msra.mxu0 0.0
        %1515 = vmatprep.subr.mxu0 0.0
        %1516 = vmatpush1.msra.mxu0 0.0
        %1517 = vmatprep.subr.mxu0 0.0
        %1518 = vmatpush1.msra.mxu0 0.0
        %1519 = vmatprep.subr.mxu0 0.0
        %1520 = vmatpush1.msra.mxu0 0.0
        %1521 = vmatprep.subr.mxu0 0.0
        %1522 = vmatpush1.msra.mxu0 0.0
        %1523 = vmatprep.subr.mxu0 0.0
        %1524 = vmatpush1.msra.mxu0 0.0
        %1525 = vmatprep.subr.mxu0 0.0
        %1526 = vmatpush1.msra.mxu0 0.0
        %1527 = vmatprep.subr.mxu0 0.0
        %1528 = vmatpush1.msra.mxu0 0.0
        %1529 = vmatprep.subr.mxu0 0.0
        %1530 = vmatpush1.msra.mxu0 0.0
        %1531 = vmatprep.mubr.f32.mxu0 0.0
        %1532 = vmatmul.mubr.f32.gmra.mrb[0].mxu0 %v1465
        %v1533 = vpop.f32.mrb[0].mxu0
        %v1534 = vadd.f32 0.0, %v1533
        %v1535 = vpop.f32.mrb[0].mxu0
        %1536 = vdwg.mxu0
        %v1539 = vunpack.c.l.s4 1966171168
        %v1540 = vunpack.c.0.s8 %v1539
        %v1541 = vlaneseq
        %v1542 = vshrl.u32 %v1541, 7
        %v1543 = vsub.s32 %v1540, %v1542
        %v1544 = vrot.slane %v1534, %v1543
        %v1545 = vcombine.high %v1544, %v1544
        %v1547 = vunpack.c.l.s4 1966171168
        %v1548 = vunpack.c.0.s8 %v1547
        %v1549 = vlaneseq
        %v1550 = vshrl.u32 %v1549, 7
        %v1551 = vsub.s32 %v1548, %v1550
        %v1552 = vrot.slane %v1544, %v1551
        %v1554 = vunpack.c.l.s4 1966171168
        %v1555 = vunpack.c.0.s8 %v1554
        %v1556 = vlaneseq
        %v1557 = vshrl.u32 %v1556, 7
        %v1558 = vsub.s32 %v1555, %v1557
        %v1559 = vrot.slane %v1545, %v1558
        %v1560 = vcombine.high %v1552, %v1552
        %v1561 = vcombine.high %v1559, %v1559
        %1566 = vst.msk [vmem:[%s230 + $0x6] sm:$0x1] %vm364, %v1552
        %1567 = vst.msk [vmem:[%s230 + $0xe] sm:$0x1] %vm364, %v1559
        %1568 = vst.msk [vmem:[%s230 + $0x16] sm:$0x1] %vm364, %v1560
        %1569 = vst.msk [vmem:[%s230 + $0x1e] sm:$0x1] %vm364, %v1561
        %v1570 = vld [vmem:[%s234] sm:$0xf]
        %1571 = vrot.lane.b32.xlu0 %v1534, 120
        %v1572 = vpop.permute.xlu0 %1571
        %v1574 = vadd.f32 %v1570, %v1572
        %1575 = vst.msk [vmem:[%s234] sm:$0xf] %vm239, %v1574
        %v1576 = vld [vmem:[%s238] sm:$0xf]
        %v1577 = vsel %vm376, %v1534, 0
        %1579 = vmatprep.subr.mxu0 0.0
        %1580 = vmatpush1.xpose.msra.mxu0 %v1577
        %1581 = vmatprep.subr.mxu0 0.0
        %1582 = vmatpush1.xpose.msra.mxu0 0.0
        %1583 = vmatprep.subr.mxu0 0.0
        %1584 = vmatpush1.xpose.msra.mxu0 0.0
        %1585 = vmatprep.subr.mxu0 0.0
        %1586 = vmatpush1.xpose.msra.mxu0 0.0
        %1587 = vmatprep.subr.mxu0 0.0
        %1588 = vmatpush1.xpose.msra.mxu0 0.0
        %1589 = vmatprep.subr.mxu0 0.0
        %1590 = vmatpush1.xpose.msra.mxu0 0.0
        %1591 = vmatprep.subr.mxu0 0.0
        %1592 = vmatpush1.xpose.msra.mxu0 0.0
        %1593 = vmatprep.subr.mxu0 0.0
        %1594 = vmatpush1.xpose.msra.mxu0 0.0
        %1595 = vmatprep.subr.mxu0 0.0
        %1596 = vmatpush1.xpose.msra.mxu0 0.0
        %1597 = vmatprep.subr.mxu0 0.0
        %1598 = vmatpush1.xpose.msra.mxu0 0.0
        %1599 = vmatprep.subr.mxu0 0.0
        %1600 = vmatpush1.xpose.msra.mxu0 0.0
        %1601 = vmatprep.subr.mxu0 0.0
        %1602 = vmatpush1.xpose.msra.mxu0 0.0
        %1603 = vmatprep.subr.mxu0 0.0
        %1604 = vmatpush1.xpose.msra.mxu0 0.0
        %1605 = vmatprep.subr.mxu0 0.0
        %1606 = vmatpush1.xpose.msra.mxu0 0.0
        %1607 = vmatprep.subr.mxu0 0.0
        %1608 = vmatpush1.xpose.msra.mxu0 0.0
        %1609 = vmatprep.subr.mxu0 0.0
        %1610 = vmatpush1.xpose.msra.mxu0 0.0
        %1611 = vmatprep.subr.mxu0 0.0
        %1612 = vmatpush1.xpose.msra.mxu0 0.0
        %1613 = vmatprep.subr.mxu0 0.0
        %1614 = vmatpush1.xpose.msra.mxu0 0.0
        %1615 = vmatprep.subr.mxu0 0.0
        %1616 = vmatpush1.xpose.msra.mxu0 0.0
        %1617 = vmatprep.subr.mxu0 0.0
        %1618 = vmatpush1.xpose.msra.mxu0 0.0
        %1619 = vmatprep.subr.mxu0 0.0
        %1620 = vmatpush1.xpose.msra.mxu0 0.0
        %1621 = vmatprep.subr.mxu0 0.0
        %1622 = vmatpush1.xpose.msra.mxu0 0.0
        %1623 = vmatprep.subr.mxu0 0.0
        %1624 = vmatpush1.xpose.msra.mxu0 0.0
        %1625 = vmatprep.subr.mxu0 0.0
        %1626 = vmatpush1.xpose.msra.mxu0 0.0
        %1627 = vmatprep.subr.mxu0 0.0
        %1628 = vmatpush1.xpose.msra.mxu0 0.0
        %1629 = vmatprep.subr.mxu0 0.0
        %1630 = vmatpush1.xpose.msra.mxu0 0.0
        %1631 = vmatprep.subr.mxu0 0.0
        %1632 = vmatpush1.xpose.msra.mxu0 0.0
        %1633 = vmatprep.subr.mxu0 0.0
        %1634 = vmatpush1.xpose.msra.mxu0 0.0
        %1635 = vmatprep.subr.mxu0 0.0
        %1636 = vmatpush1.xpose.msra.mxu0 0.0
        %1637 = vmatprep.subr.mxu0 0.0
        %1638 = vmatpush1.xpose.msra.mxu0 0.0
        %1639 = vmatprep.subr.mxu0 0.0
        %1640 = vmatpush1.xpose.msra.mxu0 0.0
        %1641 = vmatprep.subr.mxu0 0.0
        %1642 = vmatpush1.xpose.msra.mxu0 0.0
        %1643 = vmatprep.mubr.f32.mxu0 0.0
        %1644 = vmatmul.mubr.f32.gmra.mrb[0].mxu0 %v1577
        %v1645 = vpop.f32.mrb[0].mxu0
        %v1646 = vadd.f32 0.0, %v1645
        %v1647 = vpop.f32.mrb[0].mxu0
        %1648 = vdwg.mxu0
        %v1649 = vadd.f32 %v1576, %v1646
        %1650 = vst.msk [vmem:[%s238] sm:$0xf] %vm241, %v1649
        %v1651 = vld [vmem:[%s193 + $0xe] sm:$0x1]
        %v1652 = vld [vmem:[%s193 + $0x1e] sm:$0x1]
        %v1653 = vld [vmem:[%s193 + $0x2e] sm:$0x1]
        %v1654 = vld [vmem:[%s193 + $0x3e] sm:$0x1]
        %v1659 = vrot.slane %v1652, 7
        %v1660 = vsel %vm254, %v1659, %v1651
        %v1661 = vrot.slane %v1653, 6
        %v1662 = vsel %vm257, %v1661, %v1660
        %v1663 = vrot.slane %v1654, 5
        %v1664 = vsel %vm260, %v1663, %v1662
        %v1665 = vsel %vm262, %v1664, 0
        %1667 = vmatprep.subr.mxu0 0.0
        %1668 = vmatpush1.msra.mxu0 %v243
        %1669 = vmatprep.subr.mxu0 0.0
        %1670 = vmatpush1.msra.mxu0 %v244
        %1671 = vmatprep.subr.mxu0 0.0
        %1672 = vmatpush1.msra.mxu0 0.0
        %1673 = vmatprep.subr.mxu0 0.0
        %1674 = vmatpush1.msra.mxu0 0.0
        %1675 = vmatprep.subr.mxu0 0.0
        %1676 = vmatpush1.msra.mxu0 0.0
        %1677 = vmatprep.subr.mxu0 0.0
        %1678 = vmatpush1.msra.mxu0 0.0
        %1679 = vmatprep.subr.mxu0 0.0
        %1680 = vmatpush1.msra.mxu0 0.0
        %1681 = vmatprep.subr.mxu0 0.0
        %1682 = vmatpush1.msra.mxu0 0.0
        %1683 = vmatprep.subr.mxu0 0.0
        %1684 = vmatpush1.msra.mxu0 0.0
        %1685 = vmatprep.subr.mxu0 0.0
        %1686 = vmatpush1.msra.mxu0 0.0
        %1687 = vmatprep.subr.mxu0 0.0
        %1688 = vmatpush1.msra.mxu0 0.0
        %1689 = vmatprep.subr.mxu0 0.0
        %1690 = vmatpush1.msra.mxu0 0.0
        %1691 = vmatprep.subr.mxu0 0.0
        %1692 = vmatpush1.msra.mxu0 0.0
        %1693 = vmatprep.subr.mxu0 0.0
        %1694 = vmatpush1.msra.mxu0 0.0
        %1695 = vmatprep.subr.mxu0 0.0
        %1696 = vmatpush1.msra.mxu0 0.0
        %1697 = vmatprep.subr.mxu0 0.0
        %1698 = vmatpush1.msra.mxu0 0.0
        %1699 = vmatprep.subr.mxu0 0.0
        %1700 = vmatpush1.msra.mxu0 0.0
        %1701 = vmatprep.subr.mxu0 0.0
        %1702 = vmatpush1.msra.mxu0 0.0
        %1703 = vmatprep.subr.mxu0 0.0
        %1704 = vmatpush1.msra.mxu0 0.0
        %1705 = vmatprep.subr.mxu0 0.0
        %1706 = vmatpush1.msra.mxu0 0.0
        %1707 = vmatprep.subr.mxu0 0.0
        %1708 = vmatpush1.msra.mxu0 0.0
        %1709 = vmatprep.subr.mxu0 0.0
        %1710 = vmatpush1.msra.mxu0 0.0
        %1711 = vmatprep.subr.mxu0 0.0
        %1712 = vmatpush1.msra.mxu0 0.0
        %1713 = vmatprep.subr.mxu0 0.0
        %1714 = vmatpush1.msra.mxu0 0.0
        %1715 = vmatprep.subr.mxu0 0.0
        %1716 = vmatpush1.msra.mxu0 0.0
        %1717 = vmatprep.subr.mxu0 0.0
        %1718 = vmatpush1.msra.mxu0 0.0
        %1719 = vmatprep.subr.mxu0 0.0
        %1720 = vmatpush1.msra.mxu0 0.0
        %1721 = vmatprep.subr.mxu0 0.0
        %1722 = vmatpush1.msra.mxu0 0.0
        %1723 = vmatprep.subr.mxu0 0.0
        %1724 = vmatpush1.msra.mxu0 0.0
        %1725 = vmatprep.subr.mxu0 0.0
        %1726 = vmatpush1.msra.mxu0 0.0
        %1727 = vmatprep.subr.mxu0 0.0
        %1728 = vmatpush1.msra.mxu0 0.0
        %1729 = vmatprep.subr.mxu0 0.0
        %1730 = vmatpush1.msra.mxu0 0.0
        %1731 = vmatprep.mubr.f32.mxu0 0.0
        %1732 = vmatmul.mubr.f32.gmra.mrb[0].mxu0 %v1665
        %v1733 = vpop.f32.mrb[0].mxu0
        %v1734 = vadd.f32 0.0, %v1733
        %v1735 = vpop.f32.mrb[0].mxu0
        %1736 = vdwg.mxu0
        %v1739 = vunpack.c.l.s4 1966171168
        %v1740 = vunpack.c.0.s8 %v1739
        %v1741 = vlaneseq
        %v1742 = vshrl.u32 %v1741, 7
        %v1743 = vsub.s32 %v1740, %v1742
        %v1744 = vrot.slane %v1734, %v1743
        %v1745 = vcombine.high %v1744, %v1744
        %v1747 = vunpack.c.l.s4 1966171168
        %v1748 = vunpack.c.0.s8 %v1747
        %v1749 = vlaneseq
        %v1750 = vshrl.u32 %v1749, 7
        %v1751 = vsub.s32 %v1748, %v1750
        %v1752 = vrot.slane %v1744, %v1751
        %v1754 = vunpack.c.l.s4 1966171168
        %v1755 = vunpack.c.0.s8 %v1754
        %v1756 = vlaneseq
        %v1757 = vshrl.u32 %v1756, 7
        %v1758 = vsub.s32 %v1755, %v1757
        %v1759 = vrot.slane %v1745, %v1758
        %v1760 = vcombine.high %v1752, %v1752
        %v1761 = vcombine.high %v1759, %v1759
        %1766 = vst.msk [vmem:[%s230 + $0x7] sm:$0x1] %vm364, %v1752
        %1767 = vst.msk [vmem:[%s230 + $0xf] sm:$0x1] %vm364, %v1759
        %1768 = vst.msk [vmem:[%s230 + $0x17] sm:$0x1] %vm364, %v1760
        %1769 = vst.msk [vmem:[%s230 + $0x1f] sm:$0x1] %vm364, %v1761
        %v1770 = vld [vmem:[%s234] sm:$0xf]
        %1771 = vrot.lane.b32.xlu0 %v1734, 120
        %v1772 = vpop.permute.xlu0 %1771
        %v1774 = vadd.f32 %v1770, %v1772
        %1775 = vst.msk [vmem:[%s234] sm:$0xf] %vm239, %v1774
        %v1776 = vld [vmem:[%s238] sm:$0xf]
        %v1777 = vsel %vm376, %v1734, 0
        %1779 = vmatprep.subr.mxu0 0.0
        %1780 = vmatpush1.xpose.msra.mxu0 %v1777
        %1781 = vmatprep.subr.mxu0 0.0
        %1782 = vmatpush1.xpose.msra.mxu0 0.0
        %1783 = vmatprep.subr.mxu0 0.0
        %1784 = vmatpush1.xpose.msra.mxu0 0.0
        %1785 = vmatprep.subr.mxu0 0.0
        %1786 = vmatpush1.xpose.msra.mxu0 0.0
        %1787 = vmatprep.subr.mxu0 0.0
        %1788 = vmatpush1.xpose.msra.mxu0 0.0
        %1789 = vmatprep.subr.mxu0 0.0
        %1790 = vmatpush1.xpose.msra.mxu0 0.0
        %1791 = vmatprep.subr.mxu0 0.0
        %1792 = vmatpush1.xpose.msra.mxu0 0.0
        %1793 = vmatprep.subr.mxu0 0.0
        %1794 = vmatpush1.xpose.msra.mxu0 0.0
        %1795 = vmatprep.subr.mxu0 0.0
        %1796 = vmatpush1.xpose.msra.mxu0 0.0
        %1797 = vmatprep.subr.mxu0 0.0
        %1798 = vmatpush1.xpose.msra.mxu0 0.0
        %1799 = vmatprep.subr.mxu0 0.0
        %1800 = vmatpush1.xpose.msra.mxu0 0.0
        %1801 = vmatprep.subr.mxu0 0.0
        %1802 = vmatpush1.xpose.msra.mxu0 0.0
        %1803 = vmatprep.subr.mxu0 0.0
        %1804 = vmatpush1.xpose.msra.mxu0 0.0
        %1805 = vmatprep.subr.mxu0 0.0
        %1806 = vmatpush1.xpose.msra.mxu0 0.0
        %1807 = vmatprep.subr.mxu0 0.0
        %1808 = vmatpush1.xpose.msra.mxu0 0.0
        %1809 = vmatprep.subr.mxu0 0.0
        %1810 = vmatpush1.xpose.msra.mxu0 0.0
        %1811 = vmatprep.subr.mxu0 0.0
        %1812 = vmatpush1.xpose.msra.mxu0 0.0
        %1813 = vmatprep.subr.mxu0 0.0
        %1814 = vmatpush1.xpose.msra.mxu0 0.0
        %1815 = vmatprep.subr.mxu0 0.0
        %1816 = vmatpush1.xpose.msra.mxu0 0.0
        %1817 = vmatprep.subr.mxu0 0.0
        %1818 = vmatpush1.xpose.msra.mxu0 0.0
        %1819 = vmatprep.subr.mxu0 0.0
        %1820 = vmatpush1.xpose.msra.mxu0 0.0
        %1821 = vmatprep.subr.mxu0 0.0
        %1822 = vmatpush1.xpose.msra.mxu0 0.0
        %1823 = vmatprep.subr.mxu0 0.0
        %1824 = vmatpush1.xpose.msra.mxu0 0.0
        %1825 = vmatprep.subr.mxu0 0.0
        %1826 = vmatpush1.xpose.msra.mxu0 0.0
        %1827 = vmatprep.subr.mxu0 0.0
        %1828 = vmatpush1.xpose.msra.mxu0 0.0
        %1829 = vmatprep.subr.mxu0 0.0
        %1830 = vmatpush1.xpose.msra.mxu0 0.0
        %1831 = vmatprep.subr.mxu0 0.0
        %1832 = vmatpush1.xpose.msra.mxu0 0.0
        %1833 = vmatprep.subr.mxu0 0.0
        %1834 = vmatpush1.xpose.msra.mxu0 0.0
        %1835 = vmatprep.subr.mxu0 0.0
        %1836 = vmatpush1.xpose.msra.mxu0 0.0
        %1837 = vmatprep.subr.mxu0 0.0
        %1838 = vmatpush1.xpose.msra.mxu0 0.0
        %1839 = vmatprep.subr.mxu0 0.0
        %1840 = vmatpush1.xpose.msra.mxu0 0.0
        %1841 = vmatprep.subr.mxu0 0.0
        %1842 = vmatpush1.xpose.msra.mxu0 0.0
        %1843 = vmatprep.mubr.f32.mxu0 0.0
        %1844 = vmatmul.mubr.f32.gmra.mrb[0].mxu0 %v1777
        %v1845 = vpop.f32.mrb[0].mxu0
        %v1846 = vadd.f32 0.0, %v1845
        %v1847 = vpop.f32.mrb[0].mxu0
        %1848 = vdwg.mxu0
        %v1849 = vadd.f32 %v1776, %v1846
        %1850 = vst.msk [vmem:[%s238] sm:$0xf] %vm241, %v1849
        %p1851 = scmp.lt.s32.totalorder %s19, 1
        %s1852 = scalar_select %p1851, %s19, 1
        %s1853 = smul.addr %s1852, 4
        %s1854 = smul.addr %s1853, 8
        %s1855 = scalar_lea.vmem %s2, %s1854
        %p1856 = scmp.lt.s32.totalorder %s19, 1
        %s1857 = scalar_select %p1856, %s19, 1
        %s1858 = smul.addr %s1857, 4
        %s1859 = scalar_lea.vmem %s3, %s1858
        %p1860 = scmp.lt.s32.totalorder %s19, 1
        %s1861 = scalar_select %p1860, %s19, 1
        %s1862 = smul.addr %s1861, 4
        %s1863 = scalar_lea.vmem %s4, %s1862
        // Predicated region
        $region33: #{down_sample_pallas.2} parent=27 // pred_check
          %p1864 = pneg %p84
        $region34: #{down_sample_pallas.2} parent=27 // pred_check_branch
          %1866 = sbr.rel (%p1864) target = $region36
        $region35: #{down_sample_pallas.2} parent=27 // pred_region
          _
        $region36: #{down_sample_pallas.2} parent=27 // pred_fallthru
          _
        // Predicated region
        $region37: #{down_sample_pallas.2} parent=27 // pred_check
          %p1867 = pneg %p110
        $region38: #{down_sample_pallas.2} parent=27 // pred_check_branch
          %1869 = sbr.rel (%p1867) target = $region40
        $region39: #{down_sample_pallas.2} parent=27 // pred_region
          _
        $region40: #{down_sample_pallas.2} parent=27 // pred_fallthru
          _
        // Predicated region
        $region41: #{down_sample_pallas.2} parent=27 // pred_check
          %p1870 = pneg %p136
        $region42: #{down_sample_pallas.2} parent=27 // pred_check_branch
          %1872 = sbr.rel (%p1870) target = $region44
        $region43: #{down_sample_pallas.2} parent=27 // pred_region
          _
        $region44: #{down_sample_pallas.2} parent=27 // pred_fallthru
          _
      $region28: #{down_sample_pallas.2} parent=5 // pred_fallthru
        _
      %p1873 = scmp.le.s32.totalorder 2, %s14
      // Predicated region
      $region45: #{down_sample_pallas.2} parent=5 // pred_check
        %p1874 = pneg %p1873
      $region46: #{down_sample_pallas.2} parent=5 // pred_check_branch
        %1876 = sbr.rel (%p1874) target = $region48
      $region47: #{down_sample_pallas.2} parent=5 // pred_region
        %s1877 = ssub.s32 %s14, 2
        // Predicated region
        $region49: #{down_sample_pallas.2} parent=47 // pred_check
          %p1878 = pneg %p90
        $region50: #{down_sample_pallas.2} parent=47 // pred_check_branch
          %1880 = sbr.rel (%p1878) target = $region52
        $region51: #{down_sample_pallas.2} parent=47 // pred_region
          %p1881 = scmp.lt.s32.totalorder %s20, 1
          %s1882 = scalar_select %p1881, %s20, 1
          %s1883 = smul.addr %s1882, 4
          %s1884 = smul.addr %s1883, 8
          %s1885 = scalar_lea.vmem %s2, %s1884
        $region52: #{down_sample_pallas.2} parent=47 // pred_fallthru
          _
        // Predicated region
        $region53: #{down_sample_pallas.2} parent=47 // pred_check
          %p1886 = pneg %p116
        $region54: #{down_sample_pallas.2} parent=47 // pred_check_branch
          %1888 = sbr.rel (%p1886) target = $region56
        $region55: #{down_sample_pallas.2} parent=47 // pred_region
          %p1889 = scmp.lt.s32.totalorder %s20, 1
          %s1890 = scalar_select %p1889, %s20, 1
          %s1891 = smul.addr %s1890, 4
          %s1892 = scalar_lea.vmem %s3, %s1891
        $region56: #{down_sample_pallas.2} parent=47 // pred_fallthru
          _
        // Predicated region
        $region57: #{down_sample_pallas.2} parent=47 // pred_check
          %p1893 = pneg %p142
        $region58: #{down_sample_pallas.2} parent=47 // pred_check_branch
          %1895 = sbr.rel (%p1893) target = $region60
        $region59: #{down_sample_pallas.2} parent=47 // pred_region
          %p1896 = scmp.lt.s32.totalorder %s20, 1
          %s1897 = scalar_select %p1896, %s20, 1
          %s1898 = smul.addr %s1897, 4
          %s1899 = scalar_lea.vmem %s4, %s1898
        $region60: #{down_sample_pallas.2} parent=47 // pred_fallthru
          _
      $region48: #{down_sample_pallas.2} parent=5 // pred_fallthru
        _
    $region6: #{down_sample_pallas.2} parent=1 // loop_footer
      %s18 = sadd.s32 1, %s14
    $region7: #{down_sample_pallas.2} parent=1 // loop_footer_branch
      %13 = sbr.rel target = $region3
    $region8: #{down_sample_pallas.2} parent=1 // loop_exit
      _
    %1900 = vsyncpa [#allocation3], 1
    %s1901 = scalar_lea.sflag [#allocation3], 1
    %1902 = vsyncpa %s1901, 1

</llo_original>
